<compile_context>
chip_gen: v7x
topology: tpu7x:2x2x1
jax: 0.10.0
libtpu: 0.0.40
codegen_flags: <defaults>
</compile_context>

<pallas_src>
import functools

import jax
import jax.numpy as jnp
from jax.experimental import pallas as pl
from jax.experimental.pallas import tpu as pltpu

LANE = 128  # vreg lane width; narrow outputs/anchors are padded to this and sliced back


# ----------------------------- fused Pallas kernel -----------------------------

def _fused_net_kernel(idxp_ref,                      # VMEM: (LANE, 1) int32, pad = -1
                      x_ref, a_ref,                  # VMEM: node features, dense A_hat
                      hw_ref, hb_ref,                # hidden_proj
                      cw_ref, cb_ref,                # stacked conv weights (L,H,H)/(L,1,H)
                      fw_ref, fb_ref,                # conv_fc
                      clw_ref, clb_ref,              # class_proj, zero-padded to (128,128)
                      sim_ref, logit_ref,            # VMEM outputs, (N, 128) each
                      *, num_layers):
    eps = 1e-24  # == (1e-12)**2 on the squared norm; matches F.normalize eps
    n = x_ref.shape[0]

    # hidden_proj + hidden_fn (dropout is identity in eval mode)
    h = jnp.dot(x_ref[...], hw_ref[...], preferred_element_type=jnp.float32) + hb_ref[...]
    h = jnp.maximum(h, 0.0)

    # GCN conv stack; A_hat loaded once, resident across all layers.
    a = a_ref[...]
    for l in range(num_layers):
        xw = jnp.dot(h, cw_ref[l], preferred_element_type=jnp.float32)      # (N,H)@(H,H)
        h = jnp.dot(a, xw, preferred_element_type=jnp.float32) + cb_ref[l]  # (N,N)@(N,H)
        h = jnp.maximum(h, 0.0)                                             # conv_fn

    # conv_fc
    h = jnp.dot(h, fw_ref[...], preferred_element_type=jnp.float32) + fb_ref[...]

    # Row-wise L2 normalization (cosine similarity): rsqrt goes to the EUP slot.
    xn = h * jax.lax.rsqrt(jnp.maximum(jnp.sum(h * h, axis=-1, keepdims=True), eps))

    # Anchor gather as a one-hot MXU matmul. Rows >= num_anchors (and any
    # out-of-range index) carry -1 -> all-zero one-hot row -> zero anchor row.
    # normalize(h)[idx] == normalize(h[idx]), so gathering the already-normalized
    # rows is exact.
    col = jax.lax.broadcasted_iota(jnp.int32, (LANE, n), 1)
    onehot = (col == idxp_ref[...]).astype(jnp.float32)                      # (LANE, N)
    anc_n = jnp.dot(onehot, xn, preferred_element_type=jnp.float32)          # (LANE, H)

    # Cosine similarities; zero anchor rows give exactly-zero padded sim columns.
    sim = jax.lax.dot_general(xn, anc_n, (((1,), (1,)), ((), ())),
                              preferred_element_type=jnp.float32)            # (N, LANE)
    sim_ref[...] = sim

    # relative=True -> F.normalize(sim) then class_proj (zero-padded to 128 lanes).
    sn = sim * jax.lax.rsqrt(jnp.maximum(jnp.sum(sim * sim, axis=-1, keepdims=True), eps))
    logit_ref[...] = jnp.dot(sn, clw_ref[...], preferred_element_type=jnp.float32) + clb_ref[...]


# --------------------------------- glue (JAX) ----------------------------------

def build_norm_adj(edge_index, edge_weight, n):
    """Dense symmetrically normalized adjacency, GCN-style self-loops.

    Hoisted out of the per-call jitted forward: the scatter-add serializes on
    TPU and would otherwise dominate the microsecond-scale fused kernel.
    """
    a = jnp.zeros((n, n), jnp.float32)
    a = a.at[edge_index[0], edge_index[1]].add(edge_weight.astype(jnp.float32))
    # add_remaining_self_loops semantics: only add weight-1 loops where missing.
    ids = jnp.arange(n)
    diag = a[ids, ids]
    a = a.at[ids, ids].set(jnp.where(diag == 0.0, 1.0, diag))
    deg = jnp.sum(a, axis=1)
    dinv = jax.lax.rsqrt(jnp.maximum(deg, 1e-12))
    return a * dinv[:, None] * dinv[None, :]


def init_params(key, num_features, hidden, num_layers, num_anchors, num_classes):
    def dense(k, fan_in, fan_out):
        kw, kb = jax.random.split(k)
        scale = 1.0 / jnp.sqrt(jnp.float32(fan_in))
        w = jax.random.uniform(kw, (fan_in, fan_out), jnp.float32, -scale, scale)
        b = jax.random.uniform(kb, (1, fan_out), jnp.float32, -scale, scale)
        return w, b

    keys = jax.random.split(key, num_layers + 3)
    params = {}
    params["hidden_w"], params["hidden_b"] = dense(keys[0], num_features, hidden)
    params["convs"] = [dense(keys[1 + i], hidden, hidden) for i in range(num_layers)]
    params["fc_w"], params["fc_b"] = dense(keys[num_layers + 1], hidden, hidden)
    # relative=True: class_proj consumes the (N, num_anchors) relative representation.
    params["class_w"], params["class_b"] = dense(keys[num_layers + 2], num_anchors, num_classes)
    return params


def prepare_params(params, num_anchors, num_classes):
    """One-time (outside jit) parameter layout prep: stack convs, lane-pad class_proj."""
    clw = jnp.zeros((LANE, LANE), jnp.float32).at[:num_anchors, :num_classes].set(params["class_w"])
    clb = jnp.zeros((1, LANE), jnp.float32).at[:, :num_classes].set(params["class_b"])
    return {
        "hidden_w": params["hidden_w"], "hidden_b": params["hidden_b"],
        "cw": jnp.stack([w for (w, _) in params["convs"]], axis=0),   # (L, H, H)
        "cb": jnp.stack([b for (_, b) in params["convs"]], axis=0),   # (L, 1, H)
        "fc_w": params["fc_w"], "fc_b": params["fc_b"],
        "clw": clw, "clb": clb,
    }


def net_forward(prep, x, a_hat, anchor_idxs,
                *, num_layers, num_anchors, num_classes):
    n = x.shape[0]

    # Pad anchor indices to a (LANE, 1) int32 column; rows >= num_anchors get -1
    # so their one-hot rows (and sim columns) are exactly zero.
    idxp = jnp.full((LANE, 1), -1, jnp.int32).at[:num_anchors, 0].set(
        anchor_idxs.astype(jnp.int32))

    vmem = functools.partial(pl.BlockSpec, memory_space=pltpu.MemorySpace.VMEM)

    sim_pad, logit_pad = pl.pallas_call(
        functools.partial(_fused_net_kernel, num_layers=num_layers),
        out_shape=(jax.ShapeDtypeStruct((n, LANE), jnp.float32),   # similarities (padded)
                   jax.ShapeDtypeStruct((n, LANE), jnp.float32)),  # logits (padded)
        in_specs=[vmem(),            # padded anchor index column
                  vmem(), vmem(),    # x, A_hat
                  vmem(), vmem(),    # hidden_proj w, b
                  vmem(), vmem(),    # conv weights/biases (stacked)
                  vmem(), vmem(),    # conv_fc w, b
                  vmem(), vmem()],   # class_proj w, b (lane-padded)
        out_specs=(vmem(), vmem()),
        compiler_params=pltpu.CompilerParams(vmem_limit_bytes=48 * 1024 * 1024),
    )(idxp, x, a_hat,
      prep["hidden_w"], prep["hidden_b"],
      prep["cw"], prep["cb"],
      prep["fc_w"], prep["fc_b"],
      prep["clw"], prep["clb"])

    return {"logits": logit_pad[:, :num_classes],
            "similarities": sim_pad[:, :num_anchors]}


# ------------------------------------ main --------------------------------------

if __name__ == "__main__":
    N_NODES = 64
    NUM_FEATURES = 16
    HIDDEN = 32
    NUM_LAYERS = 2
    NUM_ANCHORS = 8
    NUM_CLASSES = 4

    key = jax.random.PRNGKey(0)
    k_x, k_p = jax.random.split(key)

    x = jax.random.normal(k_x, (N_NODES, NUM_FEATURES), jnp.float32)

    # Deterministic ring graph (bidirectional), unit edge weights.
    src = jnp.arange(N_NODES, dtype=jnp.int32)
    dst = (src + 1) % N_NODES
    edge_index = jnp.stack([jnp.concatenate([src, dst]),
                            jnp.concatenate([dst, src])], axis=0)          # (2, 2N)
    edge_weight = jnp.ones((2 * N_NODES,), jnp.float32)

    anchor_idxs = (jnp.arange(NUM_ANCHORS, dtype=jnp.int32) * 7) % N_NODES

    params = init_params(k_p, NUM_FEATURES, HIDDEN, NUM_LAYERS, NUM_ANCHORS, NUM_CLASSES)

    # One-time setup outside the jitted per-call path (static graph / static weights):
    a_hat = build_norm_adj(edge_index, edge_weight, N_NODES)
    prep = prepare_params(params, NUM_ANCHORS, NUM_CLASSES)
    jax.block_until_ready((a_hat, prep))

    fwd = jax.jit(functools.partial(net_forward,
                                    num_layers=NUM_LAYERS,
                                    num_anchors=NUM_ANCHORS,
                                    num_classes=NUM_CLASSES))
    out = fwd(prep, x, a_hat, anchor_idxs)
    jax.block_until_ready(out)

    assert out["logits"].shape == (N_NODES, NUM_CLASSES)
    assert out["similarities"].shape == (N_NODES, NUM_ANCHORS)
    assert bool(jnp.all(jnp.isfinite(out["logits"])))
    assert bool(jnp.all(jnp.isfinite(out["similarities"])))
    print("KERNEL_OK")
</pallas_src>

<mosaic_0001>
module attributes {stable_mosaic.version = 11 : i64} {
  func.func @_fused_net_kernel(%arg0: memref<128x1xi32, #tpu.memory_space<vmem>>, %arg1: memref<64x16xf32, #tpu.memory_space<vmem>>, %arg2: memref<64x64xf32, #tpu.memory_space<vmem>>, %arg3: memref<16x32xf32, #tpu.memory_space<vmem>>, %arg4: memref<1x32xf32, #tpu.memory_space<vmem>>, %arg5: memref<2x32x32xf32, #tpu.memory_space<vmem>>, %arg6: memref<2x1x32xf32, #tpu.memory_space<vmem>>, %arg7: memref<32x32xf32, #tpu.memory_space<vmem>>, %arg8: memref<1x32xf32, #tpu.memory_space<vmem>>, %arg9: memref<128x128xf32, #tpu.memory_space<vmem>>, %arg10: memref<1x128xf32, #tpu.memory_space<vmem>>, %arg11: memref<64x128xf32, #tpu.memory_space<vmem>>, %arg12: memref<64x128xf32, #tpu.memory_space<vmem>>) attributes {dimension_semantics = [], scalar_prefetch = 0 : i64, scratch_operands = 0 : i64, tpu.core_type = #tpu.core_type<tc>} {
    %c0 = arith.constant 0 : index
    %c0_0 = arith.constant 0 : index
    %0 = vector.load %arg1[%c0, %c0_0] : memref<64x16xf32, #tpu.memory_space<vmem>>, vector<64x16xf32>
    %c0_1 = arith.constant 0 : index
    %c0_2 = arith.constant 0 : index
    %1 = vector.load %arg3[%c0_1, %c0_2] : memref<16x32xf32, #tpu.memory_space<vmem>>, vector<16x32xf32>
    %cst = arith.constant dense<0.000000e+00> : vector<64x32xf32>
    %2 = tpu.matmul %0, %1, %cst {dimension_numbers = #tpu.dot_dimension_numbers<[1], [0], [0], [1], [0, 0, 1, 1], [], []>} : vector<64x16xf32>, vector<16x32xf32>, vector<64x32xf32> -> vector<64x32xf32>
    %c0_3 = arith.constant 0 : index
    %c0_4 = arith.constant 0 : index
    %3 = vector.load %arg4[%c0_3, %c0_4] : memref<1x32xf32, #tpu.memory_space<vmem>>, vector<1x32xf32>
    %4 = vector.broadcast %3 : vector<1x32xf32> to vector<64x32xf32>
    %5 = arith.addf %2, %4 : vector<64x32xf32>
    %cst_5 = arith.constant 0.000000e+00 : f32
    %6 = vector.broadcast %cst_5 : f32 to vector<64x32xf32>
    %7 = arith.maximumf %5, %6 : vector<64x32xf32>
    %c0_6 = arith.constant 0 : index
    %c0_7 = arith.constant 0 : index
    %8 = vector.load %arg2[%c0_6, %c0_7] : memref<64x64xf32, #tpu.memory_space<vmem>>, vector<64x64xf32>
    %c0_8 = arith.constant 0 : index
    %c0_9 = arith.constant 0 : index
    %c0_10 = arith.constant 0 : index
    %9 = vector.load %arg5[%c0_8, %c0_9, %c0_10] : memref<2x32x32xf32, #tpu.memory_space<vmem>>, vector<1x32x32xf32>
    %10 = vector.shape_cast %9 : vector<1x32x32xf32> to vector<32x32xf32>
    %cst_11 = arith.constant dense<0.000000e+00> : vector<64x32xf32>
    %11 = tpu.matmul %7, %10, %cst_11 {dimension_numbers = #tpu.dot_dimension_numbers<[1], [0], [0], [1], [0, 0, 1, 1], [], []>} : vector<64x32xf32>, vector<32x32xf32>, vector<64x32xf32> -> vector<64x32xf32>
    %cst_12 = arith.constant dense<0.000000e+00> : vector<64x32xf32>
    %12 = tpu.matmul %8, %11, %cst_12 {dimension_numbers = #tpu.dot_dimension_numbers<[1], [0], [0], [1], [0, 0, 1, 1], [], []>} : vector<64x64xf32>, vector<64x32xf32>, vector<64x32xf32> -> vector<64x32xf32>
    %c0_13 = arith.constant 0 : index
    %c0_14 = arith.constant 0 : index
    %c0_15 = arith.constant 0 : index
    %13 = vector.load %arg6[%c0_13, %c0_14, %c0_15] : memref<2x1x32xf32, #tpu.memory_space<vmem>>, vector<1x1x32xf32>
    %14 = vector.shape_cast %13 : vector<1x1x32xf32> to vector<1x32xf32>
    %15 = vector.broadcast %14 : vector<1x32xf32> to vector<64x32xf32>
    %16 = arith.addf %12, %15 : vector<64x32xf32>
    %cst_16 = arith.constant 0.000000e+00 : f32
    %17 = vector.broadcast %cst_16 : f32 to vector<64x32xf32>
    %18 = arith.maximumf %16, %17 : vector<64x32xf32>
    %c1 = arith.constant 1 : index
    %c0_17 = arith.constant 0 : index
    %c0_18 = arith.constant 0 : index
    %19 = vector.load %arg5[%c1, %c0_17, %c0_18] : memref<2x32x32xf32, #tpu.memory_space<vmem>>, vector<1x32x32xf32>
    %20 = vector.shape_cast %19 : vector<1x32x32xf32> to vector<32x32xf32>
    %cst_19 = arith.constant dense<0.000000e+00> : vector<64x32xf32>
    %21 = tpu.matmul %18, %20, %cst_19 {dimension_numbers = #tpu.dot_dimension_numbers<[1], [0], [0], [1], [0, 0, 1, 1], [], []>} : vector<64x32xf32>, vector<32x32xf32>, vector<64x32xf32> -> vector<64x32xf32>
    %cst_20 = arith.constant dense<0.000000e+00> : vector<64x32xf32>
    %22 = tpu.matmul %8, %21, %cst_20 {dimension_numbers = #tpu.dot_dimension_numbers<[1], [0], [0], [1], [0, 0, 1, 1], [], []>} : vector<64x64xf32>, vector<64x32xf32>, vector<64x32xf32> -> vector<64x32xf32>
    %c1_21 = arith.constant 1 : index
    %c0_22 = arith.constant 0 : index
    %c0_23 = arith.constant 0 : index
    %23 = vector.load %arg6[%c1_21, %c0_22, %c0_23] : memref<2x1x32xf32, #tpu.memory_space<vmem>>, vector<1x1x32xf32>
    %24 = vector.shape_cast %23 : vector<1x1x32xf32> to vector<1x32xf32>
    %25 = vector.broadcast %24 : vector<1x32xf32> to vector<64x32xf32>
    %26 = arith.addf %22, %25 : vector<64x32xf32>
    %cst_24 = arith.constant 0.000000e+00 : f32
    %27 = vector.broadcast %cst_24 : f32 to vector<64x32xf32>
    %28 = arith.maximumf %26, %27 : vector<64x32xf32>
    %c0_25 = arith.constant 0 : index
    %c0_26 = arith.constant 0 : index
    %29 = vector.load %arg7[%c0_25, %c0_26] : memref<32x32xf32, #tpu.memory_space<vmem>>, vector<32x32xf32>
    %cst_27 = arith.constant dense<0.000000e+00> : vector<64x32xf32>
    %30 = tpu.matmul %28, %29, %cst_27 {dimension_numbers = #tpu.dot_dimension_numbers<[1], [0], [0], [1], [0, 0, 1, 1], [], []>} : vector<64x32xf32>, vector<32x32xf32>, vector<64x32xf32> -> vector<64x32xf32>
    %c0_28 = arith.constant 0 : index
    %c0_29 = arith.constant 0 : index
    %31 = vector.load %arg8[%c0_28, %c0_29] : memref<1x32xf32, #tpu.memory_space<vmem>>, vector<1x32xf32>
    %32 = vector.broadcast %31 : vector<1x32xf32> to vector<64x32xf32>
    %33 = arith.addf %30, %32 : vector<64x32xf32>
    %34 = arith.mulf %33, %33 : vector<64x32xf32>
    %cst_30 = arith.constant dense<0.000000e+00> : vector<64xf32>
    %35 = vector.multi_reduction <add>, %34, %cst_30 [1] : vector<64x32xf32> to vector<64xf32>
    %36 = vector.shape_cast %35 : vector<64xf32> to vector<64x1xf32>
    %cst_31 = arith.constant 1.000000e-24 : f32
    %37 = vector.broadcast %cst_31 : f32 to vector<64x1xf32>
    %38 = arith.maximumf %36, %37 : vector<64x1xf32>
    %39 = math.rsqrt %38 : vector<64x1xf32>
    %40 = vector.broadcast %39 : vector<64x1xf32> to vector<64x32xf32>
    %41 = arith.mulf %33, %40 : vector<64x32xf32>
    %42 = tpu.iota {dimensions = array<i32: 1>} : vector<128x64xi32>
    %c0_32 = arith.constant 0 : index
    %c0_33 = arith.constant 0 : index
    %43 = vector.load %arg0[%c0_32, %c0_33] : memref<128x1xi32, #tpu.memory_space<vmem>>, vector<128x1xi32>
    %44 = vector.broadcast %43 : vector<128x1xi32> to vector<128x64xi32>
    %45 = arith.cmpi eq, %42, %44 : vector<128x64xi32>
    %46 = arith.extui %45 : vector<128x64xi1> to vector<128x64xi32>
    %47 = arith.sitofp %46 : vector<128x64xi32> to vector<128x64xf32>
    %cst_34 = arith.constant dense<0.000000e+00> : vector<128x32xf32>
    %48 = tpu.matmul %47, %41, %cst_34 {dimension_numbers = #tpu.dot_dimension_numbers<[1], [0], [0], [1], [0, 0, 1, 1], [], []>} : vector<128x64xf32>, vector<64x32xf32>, vector<128x32xf32> -> vector<128x32xf32>
    %cst_35 = arith.constant dense<0.000000e+00> : vector<64x128xf32>
    %49 = tpu.matmul %41, %48, %cst_35 {dimension_numbers = #tpu.dot_dimension_numbers<[1], [1], [0], [0], [0, 0, 1, 0], [], []>} : vector<64x32xf32>, vector<128x32xf32>, vector<64x128xf32> -> vector<64x128xf32>
    %c0_36 = arith.constant 0 : index
    %c0_37 = arith.constant 0 : index
    %50 = vector.load %arg11[%c0_36, %c0_37] : memref<64x128xf32, #tpu.memory_space<vmem>>, vector<64x128xf32>
    tpu.vector_store %arg11[%c0_36, %c0_37], %49 {strides = array<i32>} : memref<64x128xf32, #tpu.memory_space<vmem>>, vector<64x128xf32>,
    %51 = arith.mulf %49, %49 : vector<64x128xf32>
    %cst_38 = arith.constant dense<0.000000e+00> : vector<64xf32>
    %52 = vector.multi_reduction <add>, %51, %cst_38 [1] : vector<64x128xf32> to vector<64xf32>
    %53 = vector.shape_cast %52 : vector<64xf32> to vector<64x1xf32>
    %cst_39 = arith.constant 1.000000e-24 : f32
    %54 = vector.broadcast %cst_39 : f32 to vector<64x1xf32>
    %55 = arith.maximumf %53, %54 : vector<64x1xf32>
    %56 = math.rsqrt %55 : vector<64x1xf32>
    %57 = vector.broadcast %56 : vector<64x1xf32> to vector<64x128xf32>
    %58 = arith.mulf %49, %57 : vector<64x128xf32>
    %c0_40 = arith.constant 0 : index
    %c0_41 = arith.constant 0 : index
    %59 = vector.load %arg9[%c0_40, %c0_41] : memref<128x128xf32, #tpu.memory_space<vmem>>, vector<128x128xf32>
    %cst_42 = arith.constant dense<0.000000e+00> : vector<64x128xf32>
    %60 = tpu.matmul %58, %59, %cst_42 {dimension_numbers = #tpu.dot_dimension_numbers<[1], [0], [0], [1], [0, 0, 1, 1], [], []>} : vector<64x128xf32>, vector<128x128xf32>, vector<64x128xf32> -> vector<64x128xf32>
    %c0_43 = arith.constant 0 : index
    %c0_44 = arith.constant 0 : index
    %61 = vector.load %arg10[%c0_43, %c0_44] : memref<1x128xf32, #tpu.memory_space<vmem>>, vector<1x128xf32>
    %62 = vector.broadcast %61 : vector<1x128xf32> to vector<64x128xf32>
    %63 = arith.addf %60, %62 : vector<64x128xf32>
    %c0_45 = arith.constant 0 : index
    %c0_46 = arith.constant 0 : index
    %64 = vector.load %arg12[%c0_45, %c0_46] : memref<64x128xf32, #tpu.memory_space<vmem>>, vector<64x128xf32>
    tpu.vector_store %arg12[%c0_45, %c0_46], %63 {strides = array<i32>} : memref<64x128xf32, #tpu.memory_space<vmem>>, vector<64x128xf32>,
    return
  }
}

</mosaic_0001>

<llo_original>
// kernel: net_forward.1
$region0: #{net_forward.1}
  #allocation0 [shape = 'u32[]', space=smem, size = 0x4, offset = 0x4, fixed_abs, tag = 'smem constant byte address 0x4 - core index']
  #allocation1 [shape = 'u32[144,128]{1,0:T(1,128)}', space=vmem, size = 0x12000, scoped, tag = 'internal scratch']
  %s0 = inlined_call_operand.vmem [shape: s32[128,1], index: 0, kind: input, shape index: {}]
  %s1 = inlined_call_operand.vmem [shape: f32[64,16], index: 1, kind: input, shape index: {}]
  %s2 = inlined_call_operand.vmem [shape: f32[64,64], index: 2, kind: input, shape index: {}]
  %s3 = inlined_call_operand.vmem [shape: f32[16,32], index: 3, kind: input, shape index: {}]
  %s4 = inlined_call_operand.hbm [shape: f32[1,32], index: 4, kind: input, shape index: {}]
  %s5 = inlined_call_operand.hbm [shape: f32[2,32,32], index: 5, kind: input, shape index: {}]
  %s6 = inlined_call_operand.hbm [shape: f32[2,1,32], index: 6, kind: input, shape index: {}]
  %s7 = inlined_call_operand.vmem [shape: f32[32,32], index: 7, kind: input, shape index: {}]
  %s8 = inlined_call_operand.hbm [shape: f32[1,32], index: 8, kind: input, shape index: {}]
  %s9 = inlined_call_operand.vmem [shape: f32[128,128], index: 9, kind: input, shape index: {}]
  %s10 = inlined_call_operand.hbm [shape: f32[1,128], index: 10, kind: input, shape index: {}]
  %s11 = inlined_call_operand.vmem [shape: f32[64,128], index: 11, kind: output, shape index: {0}]
  %s12 = inlined_call_operand.vmem [shape: f32[64,128], index: 12, kind: output, shape index: {1}]
  %13 = xla_tuple %s11, %s12
  %s14 = sld [smem:[#allocation0]]
  $region82: #{net_forward.1} parent=0
    _
  %s16 = ssub.s32 1, %s14
  %s17 = scalar_select 0, %s16, %s14
  $region1: #{net_forward.1} parent=0
    #allocation2 [shape = 'u8[512]{0}', space=vmem, size = 0x400, scoped, tag = 'input window, operand 4, single buffered']
    #allocation3 [shape = 's32[1]{0}', space=sflag, size = 0x4, scoped, tag = 'scoped memory for net_forward.1']
    #allocation4 [shape = 'u8[32768]{0}', space=vmem, size = 0x8000, scoped, tag = 'input window, operand 5, single buffered']
    #allocation5 [shape = 's32[1]{0}', space=sflag, size = 0x4, scoped, tag = 'scoped memory for net_forward.1']
    #allocation6 [shape = 'u8[1024]{0}', space=vmem, size = 0x400, scoped, tag = 'input window, operand 6, single buffered']
    #allocation7 [shape = 'u8[512]{0}', space=vmem, size = 0x400, scoped, tag = 'input window, operand 8, single buffered']
    #allocation8 [shape = 's32[1]{0}', space=sflag, size = 0x4, scoped, tag = 'scoped memory for net_forward.1']
    #allocation9 [shape = 'u8[512]{0}', space=vmem, size = 0x400, scoped, tag = 'input window, operand 10, single buffered']
    %18 = vsyncpa [#allocation3], 0
    %19 = vsyncpa [#allocation5], 0
    %20 = vsyncpa [#allocation8], 0
    // Predicated region
    $region2: #{net_forward.1} parent=1 // pred_check
      _
    $region3: #{net_forward.1} parent=1 // pred_check_branch
      %22 = sbr.rel (0) target = $region5
    $region4: #{net_forward.1} parent=1 // pred_region
      _
    $region5: #{net_forward.1} parent=1 // pred_fallthru
      _
    // Predicated region
    $region6: #{net_forward.1} parent=1 // pred_check
      _
    $region7: #{net_forward.1} parent=1 // pred_check_branch
      %24 = sbr.rel (0) target = $region9
    $region8: #{net_forward.1} parent=1 // pred_region
      _
    $region9: #{net_forward.1} parent=1 // pred_fallthru
      _
    // Predicated region
    $region10: #{net_forward.1} parent=1 // pred_check
      _
    $region11: #{net_forward.1} parent=1 // pred_check_branch
      %26 = sbr.rel (0) target = $region13
    $region12: #{net_forward.1} parent=1 // pred_region
      _
    $region13: #{net_forward.1} parent=1 // pred_fallthru
      _
    // Predicated region
    $region14: #{net_forward.1} parent=1 // pred_check
      _
    $region15: #{net_forward.1} parent=1 // pred_check_branch
      %28 = sbr.rel (0) target = $region17
    $region16: #{net_forward.1} parent=1 // pred_region
      _
    $region17: #{net_forward.1} parent=1 // pred_fallthru
      _
    // Predicated region
    $region18: #{net_forward.1} parent=1 // pred_check
      _
    $region19: #{net_forward.1} parent=1 // pred_check_branch
      %30 = sbr.rel (0) target = $region21
    $region20: #{net_forward.1} parent=1 // pred_region
      %s32 = ssub.s32 16, 16
      %33 = vsyncadd [#allocation3], %s32
      %s35 = sshll.u32 [#allocation2], 4
      %s36 = int_to_ptr.vmem [resolvable:$true] %s35
      %38 = dma.hbm_to_vmem [thread:$0]  %s4, 16, %s36, [#allocation3]
    $region21: #{net_forward.1} parent=1 // pred_fallthru
      _
    // Predicated region
    $region22: #{net_forward.1} parent=1 // pred_check
      _
    $region23: #{net_forward.1} parent=1 // pred_check_branch
      %40 = sbr.rel (0) target = $region25
    $region24: #{net_forward.1} parent=1 // pred_region
      %s42 = ssub.s32 1024, 1024
      %43 = vsyncadd [#allocation5], %s42
      %s44 = sshll.u32 [#allocation4], 4
      %s45 = int_to_ptr.vmem [resolvable:$true] %s44
      %50 = dma.hbm_to_vmem [thread:$0]  %s5, 1024, %s45, [#allocation5], 128, 128, 8
    $region25: #{net_forward.1} parent=1 // pred_fallthru
      _
    // Predicated region
    $region26: #{net_forward.1} parent=1 // pred_check
      _
    $region27: #{net_forward.1} parent=1 // pred_check_branch
      %52 = sbr.rel (0) target = $region29
    $region28: #{net_forward.1} parent=1 // pred_region
      %s54 = ssub.s32 32, 32
      %55 = vsyncadd [#allocation5], %s54
      %s56 = sshll.u32 [#allocation6], 4
      %s57 = int_to_ptr.vmem [resolvable:$true] %s56
      %62 = dma.hbm_to_vmem [thread:$0]  %s6, 32, %s57, [#allocation5], 16, 16, 1
    $region29: #{net_forward.1} parent=1 // pred_fallthru
      _
    // Predicated region
    $region30: #{net_forward.1} parent=1 // pred_check
      _
    $region31: #{net_forward.1} parent=1 // pred_check_branch
      %64 = sbr.rel (0) target = $region33
    $region32: #{net_forward.1} parent=1 // pred_region
      _
    $region33: #{net_forward.1} parent=1 // pred_fallthru
      _
    // Predicated region
    $region34: #{net_forward.1} parent=1 // pred_check
      _
    $region35: #{net_forward.1} parent=1 // pred_check_branch
      %66 = sbr.rel (0) target = $region37
    $region36: #{net_forward.1} parent=1 // pred_region
      %s68 = ssub.s32 16, 16
      %69 = vsyncadd [#allocation8], %s68
      %s71 = sshll.u32 [#allocation7], 4
      %s72 = int_to_ptr.vmem [resolvable:$true] %s71
      %74 = dma.hbm_to_vmem [thread:$0]  %s8, 16, %s72, [#allocation8]
    $region37: #{net_forward.1} parent=1 // pred_fallthru
      _
    // Predicated region
    $region38: #{net_forward.1} parent=1 // pred_check
      _
    $region39: #{net_forward.1} parent=1 // pred_check_branch
      %76 = sbr.rel (0) target = $region41
    $region40: #{net_forward.1} parent=1 // pred_region
      _
    $region41: #{net_forward.1} parent=1 // pred_fallthru
      _
    // Predicated region
    $region42: #{net_forward.1} parent=1 // pred_check
      _
    $region43: #{net_forward.1} parent=1 // pred_check_branch
      %78 = sbr.rel (0) target = $region45
    $region44: #{net_forward.1} parent=1 // pred_region
      %s80 = ssub.s32 16, 16
      %81 = vsyncadd [#allocation8], %s80
      %s83 = sshll.u32 [#allocation9], 4
      %s84 = int_to_ptr.vmem [resolvable:$true] %s83
      %86 = dma.hbm_to_vmem [thread:$0]  %s10, 16, %s84, [#allocation8]
    $region45: #{net_forward.1} parent=1 // pred_fallthru
      _
    // Predicated region
    $region46: #{net_forward.1} parent=1 // pred_check
      _
    $region47: #{net_forward.1} parent=1 // pred_check_branch
      %88 = sbr.rel (0) target = $region49
    $region48: #{net_forward.1} parent=1 // pred_region
      %89 = dma.done [#allocation3], 16
    $region49: #{net_forward.1} parent=1 // pred_fallthru
      _
    // Predicated region
    $region50: #{net_forward.1} parent=1 // pred_check
      _
    $region51: #{net_forward.1} parent=1 // pred_check_branch
      %91 = sbr.rel (0) target = $region53
    $region52: #{net_forward.1} parent=1 // pred_region
      %92 = dma.done [#allocation5], 1024
    $region53: #{net_forward.1} parent=1 // pred_fallthru
      _
    // Predicated region
    $region54: #{net_forward.1} parent=1 // pred_check
      _
    $region55: #{net_forward.1} parent=1 // pred_check_branch
      %94 = sbr.rel (0) target = $region57
    $region56: #{net_forward.1} parent=1 // pred_region
      %95 = dma.done [#allocation5], 32
    $region57: #{net_forward.1} parent=1 // pred_fallthru
      _
    // Predicated region
    $region58: #{net_forward.1} parent=1 // pred_check
      _
    $region59: #{net_forward.1} parent=1 // pred_check_branch
      %97 = sbr.rel (0) target = $region61
    $region60: #{net_forward.1} parent=1 // pred_region
      %98 = dma.done [#allocation8], 16
    $region61: #{net_forward.1} parent=1 // pred_fallthru
      _
    // Predicated region
    $region62: #{net_forward.1} parent=1 // pred_check
      _
    $region63: #{net_forward.1} parent=1 // pred_check_branch
      %100 = sbr.rel (0) target = $region65
    $region64: #{net_forward.1} parent=1 // pred_region
      %101 = dma.done [#allocation8], 16
    $region65: #{net_forward.1} parent=1 // pred_fallthru
      _
    %v102 = vld [vmem:[%s1] sm:$0xff]
    %v103 = vld [vmem:[%s1 + $0x8] sm:$0xff]
    %v104 = vld [vmem:[%s1 + $0x10] sm:$0xff]
    %v105 = vld [vmem:[%s1 + $0x18] sm:$0xff]
    %v106 = vld [vmem:[%s1 + $0x20] sm:$0xff]
    %v107 = vld [vmem:[%s1 + $0x28] sm:$0xff]
    %v108 = vld [vmem:[%s1 + $0x30] sm:$0xff]
    %v109 = vld [vmem:[%s1 + $0x38] sm:$0xff]
    %v110 = vld [vmem:[%s3] sm:$0xff]
    %v111 = vld [vmem:[%s3 + $0x8] sm:$0xff]
    %v112 = vld [vmem:[#allocation2] sm:$0x1]
    %v114 = vlaneseq
    %v115 = vshrl.u32 %v114, 7
    %v116 = vsub.s32 0, %v115
    %v117 = vrot.slane %v112, %v116
    %vm119 = vcmask 130048
    %v121 = vsel %vm119, %v102, 0
    %v124 = vsel %vm119, %v103, 0
    %v127 = vsel %vm119, %v104, 0
    %v130 = vsel %vm119, %v105, 0
    %v133 = vsel %vm119, %v106, 0
    %v136 = vsel %vm119, %v107, 0
    %v139 = vsel %vm119, %v108, 0
    %v142 = vsel %vm119, %v109, 0
    %144 = vmatprep.subr.mxu0 0.0
    %145 = vmatpush1.msra.mxu0 %v110
    %146 = vmatprep.subr.mxu0 0.0
    %147 = vmatpush1.msra.mxu0 %v111
    %148 = vmatprep.subr.mxu0 0.0
    %149 = vmatpush1.msra.mxu0 0.0
    %150 = vmatprep.subr.mxu0 0.0
    %151 = vmatpush1.msra.mxu0 0.0
    %152 = vmatprep.subr.mxu0 0.0
    %153 = vmatpush1.msra.mxu0 0.0
    %154 = vmatprep.subr.mxu0 0.0
    %155 = vmatpush1.msra.mxu0 0.0
    %156 = vmatprep.subr.mxu0 0.0
    %157 = vmatpush1.msra.mxu0 0.0
    %158 = vmatprep.subr.mxu0 0.0
    %159 = vmatpush1.msra.mxu0 0.0
    %160 = vmatprep.subr.mxu0 0.0
    %161 = vmatpush1.msra.mxu0 0.0
    %162 = vmatprep.subr.mxu0 0.0
    %163 = vmatpush1.msra.mxu0 0.0
    %164 = vmatprep.subr.mxu0 0.0
    %165 = vmatpush1.msra.mxu0 0.0
    %166 = vmatprep.subr.mxu0 0.0
    %167 = vmatpush1.msra.mxu0 0.0
    %168 = vmatprep.subr.mxu0 0.0
    %169 = vmatpush1.msra.mxu0 0.0
    %170 = vmatprep.subr.mxu0 0.0
    %171 = vmatpush1.msra.mxu0 0.0
    %172 = vmatprep.subr.mxu0 0.0
    %173 = vmatpush1.msra.mxu0 0.0
    %174 = vmatprep.subr.mxu0 0.0
    %175 = vmatpush1.msra.mxu0 0.0
    %176 = vmatprep.subr.mxu0 0.0
    %177 = vmatpush1.msra.mxu0 0.0
    %178 = vmatprep.subr.mxu0 0.0
    %179 = vmatpush1.msra.mxu0 0.0
    %180 = vmatprep.subr.mxu0 0.0
    %181 = vmatpush1.msra.mxu0 0.0
    %182 = vmatprep.subr.mxu0 0.0
    %183 = vmatpush1.msra.mxu0 0.0
    %184 = vmatprep.subr.mxu0 0.0
    %185 = vmatpush1.msra.mxu0 0.0
    %186 = vmatprep.subr.mxu0 0.0
    %187 = vmatpush1.msra.mxu0 0.0
    %188 = vmatprep.subr.mxu0 0.0
    %189 = vmatpush1.msra.mxu0 0.0
    %190 = vmatprep.subr.mxu0 0.0
    %191 = vmatpush1.msra.mxu0 0.0
    %192 = vmatprep.subr.mxu0 0.0
    %193 = vmatpush1.msra.mxu0 0.0
    %194 = vmatprep.subr.mxu0 0.0
    %195 = vmatpush1.msra.mxu0 0.0
    %196 = vmatprep.subr.mxu0 0.0
    %197 = vmatpush1.msra.mxu0 0.0
    %198 = vmatprep.subr.mxu0 0.0
    %199 = vmatpush1.msra.mxu0 0.0
    %200 = vmatprep.subr.mxu0 0.0
    %201 = vmatpush1.msra.mxu0 0.0
    %202 = vmatprep.subr.mxu0 0.0
    %203 = vmatpush1.msra.mxu0 0.0
    %204 = vmatprep.subr.mxu0 0.0
    %205 = vmatpush1.msra.mxu0 0.0
    %206 = vmatprep.subr.mxu0 0.0
    %207 = vmatpush1.msra.mxu0 0.0
    %208 = vmatprep.mubr.f32.mxu0 0.0
    %209 = vmatmul.mubr.f32.gmra.mrb[0].mxu0 %v121
    %v210 = vpop.f32.mrb[0].mxu0
    %v211 = vadd.f32 %v117, %v210
    %v212 = vpop.f32.mrb[0].mxu0
    %213 = vmatprep.mubr.f32.mxu0 0.0
    %214 = vmatmul.mubr.f32.gmra.mrb[0].mxu0 %v124
    %v215 = vpop.f32.mrb[0].mxu0
    %v216 = vadd.f32 %v117, %v215
    %v217 = vpop.f32.mrb[0].mxu0
    %218 = vmatprep.mubr.f32.mxu0 0.0
    %219 = vmatmul.mubr.f32.gmra.mrb[0].mxu0 %v127
    %v220 = vpop.f32.mrb[0].mxu0
    %v221 = vadd.f32 %v117, %v220
    %v222 = vpop.f32.mrb[0].mxu0
    %223 = vmatprep.mubr.f32.mxu0 0.0
    %224 = vmatmul.mubr.f32.gmra.mrb[0].mxu0 %v130
    %v225 = vpop.f32.mrb[0].mxu0
    %v226 = vadd.f32 %v117, %v225
    %v227 = vpop.f32.mrb[0].mxu0
    %228 = vmatprep.mubr.f32.mxu0 0.0
    %229 = vmatmul.mubr.f32.gmra.mrb[0].mxu0 %v133
    %v230 = vpop.f32.mrb[0].mxu0
    %v231 = vadd.f32 %v117, %v230
    %v232 = vpop.f32.mrb[0].mxu0
    %233 = vmatprep.mubr.f32.mxu0 0.0
    %234 = vmatmul.mubr.f32.gmra.mrb[0].mxu0 %v136
    %v235 = vpop.f32.mrb[0].mxu0
    %v236 = vadd.f32 %v117, %v235
    %v237 = vpop.f32.mrb[0].mxu0
    %238 = vmatprep.mubr.f32.mxu0 0.0
    %239 = vmatmul.mubr.f32.gmra.mrb[0].mxu0 %v139
    %v240 = vpop.f32.mrb[0].mxu0
    %v241 = vadd.f32 %v117, %v240
    %v242 = vpop.f32.mrb[0].mxu0
    %243 = vmatprep.mubr.f32.mxu0 0.0
    %244 = vmatmul.mubr.f32.gmra.mrb[0].mxu0 %v142
    %v245 = vpop.f32.mrb[0].mxu0
    %v246 = vadd.f32 %v117, %v245
    %v247 = vpop.f32.mrb[0].mxu0
    %248 = vdwg.mxu0
    %v249 = vmax.f32 %v211, 0.0
    %v250 = vmax.f32 %v216, 0.0
    %v251 = vmax.f32 %v221, 0.0
    %v252 = vmax.f32 %v226, 0.0
    %v253 = vmax.f32 %v231, 0.0
    %v254 = vmax.f32 %v236, 0.0
    %v255 = vmax.f32 %v241, 0.0
    %v256 = vmax.f32 %v246, 0.0
    %v257 = vld [vmem:[%s2] sm:$0xff]
    %v258 = vld [vmem:[%s2 + $0x8] sm:$0xff]
    %v259 = vld [vmem:[%s2 + $0x10] sm:$0xff]
    %v260 = vld [vmem:[%s2 + $0x18] sm:$0xff]
    %v261 = vld [vmem:[%s2 + $0x20] sm:$0xff]
    %v262 = vld [vmem:[%s2 + $0x28] sm:$0xff]
    %v263 = vld [vmem:[%s2 + $0x30] sm:$0xff]
    %v264 = vld [vmem:[%s2 + $0x38] sm:$0xff]
    %v265 = vld [vmem:[#allocation4] sm:$0xff]
    %v266 = vld [vmem:[#allocation4 + $0x8] sm:$0xff]
    %v267 = vld [vmem:[#allocation4 + $0x10] sm:$0xff]
    %v268 = vld [vmem:[#allocation4 + $0x18] sm:$0xff]
    %vm269 = vcmask 261120
    %v271 = vsel %vm269, %v249, 0
    %v274 = vsel %vm269, %v250, 0
    %v277 = vsel %vm269, %v251, 0
    %v280 = vsel %vm269, %v252, 0
    %v283 = vsel %vm269, %v253, 0
    %v286 = vsel %vm269, %v254, 0
    %v289 = vsel %vm269, %v255, 0
    %v292 = vsel %vm269, %v256, 0
    %294 = vmatprep.subr.mxu0 0.0
    %295 = vmatpush1.msra.mxu0 %v265
    %296 = vmatprep.subr.mxu0 0.0
    %297 = vmatpush1.msra.mxu0 %v266
    %298 = vmatprep.subr.mxu0 0.0
    %299 = vmatpush1.msra.mxu0 %v267
    %300 = vmatprep.subr.mxu0 0.0
    %301 = vmatpush1.msra.mxu0 %v268
    %302 = vmatprep.subr.mxu0 0.0
    %303 = vmatpush1.msra.mxu0 0.0
    %304 = vmatprep.subr.mxu0 0.0
    %305 = vmatpush1.msra.mxu0 0.0
    %306 = vmatprep.subr.mxu0 0.0
    %307 = vmatpush1.msra.mxu0 0.0
    %308 = vmatprep.subr.mxu0 0.0
    %309 = vmatpush1.msra.mxu0 0.0
    %310 = vmatprep.subr.mxu0 0.0
    %311 = vmatpush1.msra.mxu0 0.0
    %312 = vmatprep.subr.mxu0 0.0
    %313 = vmatpush1.msra.mxu0 0.0
    %314 = vmatprep.subr.mxu0 0.0
    %315 = vmatpush1.msra.mxu0 0.0
    %316 = vmatprep.subr.mxu0 0.0
    %317 = vmatpush1.msra.mxu0 0.0
    %318 = vmatprep.subr.mxu0 0.0
    %319 = vmatpush1.msra.mxu0 0.0
    %320 = vmatprep.subr.mxu0 0.0
    %321 = vmatpush1.msra.mxu0 0.0
    %322 = vmatprep.subr.mxu0 0.0
    %323 = vmatpush1.msra.mxu0 0.0
    %324 = vmatprep.subr.mxu0 0.0
    %325 = vmatpush1.msra.mxu0 0.0
    %326 = vmatprep.subr.mxu0 0.0
    %327 = vmatpush1.msra.mxu0 0.0
    %328 = vmatprep.subr.mxu0 0.0
    %329 = vmatpush1.msra.mxu0 0.0
    %330 = vmatprep.subr.mxu0 0.0
    %331 = vmatpush1.msra.mxu0 0.0
    %332 = vmatprep.subr.mxu0 0.0
    %333 = vmatpush1.msra.mxu0 0.0
    %334 = vmatprep.subr.mxu0 0.0
    %335 = vmatpush1.msra.mxu0 0.0
    %336 = vmatprep.subr.mxu0 0.0
    %337 = vmatpush1.msra.mxu0 0.0
    %338 = vmatprep.subr.mxu0 0.0
    %339 = vmatpush1.msra.mxu0 0.0
    %340 = vmatprep.subr.mxu0 0.0
    %341 = vmatpush1.msra.mxu0 0.0
    %342 = vmatprep.subr.mxu0 0.0
    %343 = vmatpush1.msra.mxu0 0.0
    %344 = vmatprep.subr.mxu0 0.0
    %345 = vmatpush1.msra.mxu0 0.0
    %346 = vmatprep.subr.mxu0 0.0
    %347 = vmatpush1.msra.mxu0 0.0
    %348 = vmatprep.subr.mxu0 0.0
    %349 = vmatpush1.msra.mxu0 0.0
    %350 = vmatprep.subr.mxu0 0.0
    %351 = vmatpush1.msra.mxu0 0.0
    %352 = vmatprep.subr.mxu0 0.0
    %353 = vmatpush1.msra.mxu0 0.0
    %354 = vmatprep.subr.mxu0 0.0
    %355 = vmatpush1.msra.mxu0 0.0
    %356 = vmatprep.subr.mxu0 0.0
    %357 = vmatpush1.msra.mxu0 0.0
    %358 = vmatprep.mubr.f32.mxu0 0.0
    %359 = vmatmul.mubr.f32.gmra.mrb[0].mxu0 %v271
    %v360 = vpop.f32.mrb[0].mxu0
    %v361 = vadd.f32 0.0, %v360
    %v362 = vpop.f32.mrb[0].mxu0
    %363 = vmatprep.mubr.f32.mxu0 0.0
    %364 = vmatmul.mubr.f32.gmra.mrb[0].mxu0 %v274
    %v365 = vpop.f32.mrb[0].mxu0
    %v366 = vadd.f32 0.0, %v365
    %v367 = vpop.f32.mrb[0].mxu0
    %368 = vmatprep.mubr.f32.mxu0 0.0
    %369 = vmatmul.mubr.f32.gmra.mrb[0].mxu0 %v277
    %v370 = vpop.f32.mrb[0].mxu0
    %v371 = vadd.f32 0.0, %v370
    %v372 = vpop.f32.mrb[0].mxu0
    %373 = vmatprep.mubr.f32.mxu0 0.0
    %374 = vmatmul.mubr.f32.gmra.mrb[0].mxu0 %v280
    %v375 = vpop.f32.mrb[0].mxu0
    %v376 = vadd.f32 0.0, %v375
    %v377 = vpop.f32.mrb[0].mxu0
    %378 = vmatprep.mubr.f32.mxu0 0.0
    %379 = vmatmul.mubr.f32.gmra.mrb[0].mxu0 %v283
    %v380 = vpop.f32.mrb[0].mxu0
    %v381 = vadd.f32 0.0, %v380
    %v382 = vpop.f32.mrb[0].mxu0
    %383 = vmatprep.mubr.f32.mxu0 0.0
    %384 = vmatmul.mubr.f32.gmra.mrb[0].mxu0 %v286
    %v385 = vpop.f32.mrb[0].mxu0
    %v386 = vadd.f32 0.0, %v385
    %v387 = vpop.f32.mrb[0].mxu0
    %388 = vmatprep.mubr.f32.mxu0 0.0
    %389 = vmatmul.mubr.f32.gmra.mrb[0].mxu0 %v289
    %v390 = vpop.f32.mrb[0].mxu0
    %v391 = vadd.f32 0.0, %v390
    %v392 = vpop.f32.mrb[0].mxu0
    %393 = vmatprep.mubr.f32.mxu0 0.0
    %394 = vmatmul.mubr.f32.gmra.mrb[0].mxu0 %v292
    %v395 = vpop.f32.mrb[0].mxu0
    %v396 = vadd.f32 0.0, %v395
    %v397 = vpop.f32.mrb[0].mxu0
    %398 = vdwg.mxu0
    %v399 = vld [vmem:[#allocation6] sm:$0x1]
    %v401 = vlaneseq
    %v402 = vshrl.u32 %v401, 7
    %v403 = vsub.s32 0, %v402
    %v404 = vrot.slane %v399, %v403
    %vm406 = vcmask 523264
    %v408 = vsel %vm406, %v257, 0
    %v411 = vsel %vm406, %v258, 0
    %v414 = vsel %vm406, %v259, 0
    %v417 = vsel %vm406, %v260, 0
    %v420 = vsel %vm406, %v261, 0
    %v423 = vsel %vm406, %v262, 0
    %v426 = vsel %vm406, %v263, 0
    %v429 = vsel %vm406, %v264, 0
    %431 = vmatprep.subr.mxu0 0.0
    %432 = vmatpush1.msra.mxu0 %v361
    %433 = vmatprep.subr.mxu0 0.0
    %434 = vmatpush1.msra.mxu0 %v366
    %435 = vmatprep.subr.mxu0 0.0
    %436 = vmatpush1.msra.mxu0 %v371
    %437 = vmatprep.subr.mxu0 0.0
    %438 = vmatpush1.msra.mxu0 %v376
    %439 = vmatprep.subr.mxu0 0.0
    %440 = vmatpush1.msra.mxu0 %v381
    %441 = vmatprep.subr.mxu0 0.0
    %442 = vmatpush1.msra.mxu0 %v386
    %443 = vmatprep.subr.mxu0 0.0
    %444 = vmatpush1.msra.mxu0 %v391
    %445 = vmatprep.subr.mxu0 0.0
    %446 = vmatpush1.msra.mxu0 %v396
    %447 = vmatprep.subr.mxu0 0.0
    %448 = vmatpush1.msra.mxu0 0.0
    %449 = vmatprep.subr.mxu0 0.0
    %450 = vmatpush1.msra.mxu0 0.0
    %451 = vmatprep.subr.mxu0 0.0
    %452 = vmatpush1.msra.mxu0 0.0
    %453 = vmatprep.subr.mxu0 0.0
    %454 = vmatpush1.msra.mxu0 0.0
    %455 = vmatprep.subr.mxu0 0.0
    %456 = vmatpush1.msra.mxu0 0.0
    %457 = vmatprep.subr.mxu0 0.0
    %458 = vmatpush1.msra.mxu0 0.0
    %459 = vmatprep.subr.mxu0 0.0
    %460 = vmatpush1.msra.mxu0 0.0
    %461 = vmatprep.subr.mxu0 0.0
    %462 = vmatpush1.msra.mxu0 0.0
    %463 = vmatprep.subr.mxu0 0.0
    %464 = vmatpush1.msra.mxu0 0.0
    %465 = vmatprep.subr.mxu0 0.0
    %466 = vmatpush1.msra.mxu0 0.0
    %467 = vmatprep.subr.mxu0 0.0
    %468 = vmatpush1.msra.mxu0 0.0
    %469 = vmatprep.subr.mxu0 0.0
    %470 = vmatpush1.msra.mxu0 0.0
    %471 = vmatprep.subr.mxu0 0.0
    %472 = vmatpush1.msra.mxu0 0.0
    %473 = vmatprep.subr.mxu0 0.0
    %474 = vmatpush1.msra.mxu0 0.0
    %475 = vmatprep.subr.mxu0 0.0
    %476 = vmatpush1.msra.mxu0 0.0
    %477 = vmatprep.subr.mxu0 0.0
    %478 = vmatpush1.msra.mxu0 0.0
    %479 = vmatprep.subr.mxu0 0.0
    %480 = vmatpush1.msra.mxu0 0.0
    %481 = vmatprep.subr.mxu0 0.0
    %482 = vmatpush1.msra.mxu0 0.0
    %483 = vmatprep.subr.mxu0 0.0
    %484 = vmatpush1.msra.mxu0 0.0
    %485 = vmatprep.subr.mxu0 0.0
    %486 = vmatpush1.msra.mxu0 0.0
    %487 = vmatprep.subr.mxu0 0.0
    %488 = vmatpush1.msra.mxu0 0.0
    %489 = vmatprep.subr.mxu0 0.0
    %490 = vmatpush1.msra.mxu0 0.0
    %491 = vmatprep.subr.mxu0 0.0
    %492 = vmatpush1.msra.mxu0 0.0
    %493 = vmatprep.subr.mxu0 0.0
    %494 = vmatpush1.msra.mxu0 0.0
    %495 = vmatprep.mubr.f32.mxu0 0.0
    %496 = vmatmul.mubr.f32.gmra.mrb[0].mxu0 %v408
    %v497 = vpop.f32.mrb[0].mxu0
    %v498 = vadd.f32 %v404, %v497
    %v499 = vpop.f32.mrb[0].mxu0
    %500 = vmatprep.mubr.f32.mxu0 0.0
    %501 = vmatmul.mubr.f32.gmra.mrb[0].mxu0 %v411
    %v502 = vpop.f32.mrb[0].mxu0
    %v503 = vadd.f32 %v404, %v502
    %v504 = vpop.f32.mrb[0].mxu0
    %505 = vmatprep.mubr.f32.mxu0 0.0
    %506 = vmatmul.mubr.f32.gmra.mrb[0].mxu0 %v414
    %v507 = vpop.f32.mrb[0].mxu0
    %v508 = vadd.f32 %v404, %v507
    %v509 = vpop.f32.mrb[0].mxu0
    %510 = vmatprep.mubr.f32.mxu0 0.0
    %511 = vmatmul.mubr.f32.gmra.mrb[0].mxu0 %v417
    %v512 = vpop.f32.mrb[0].mxu0
    %v513 = vadd.f32 %v404, %v512
    %v514 = vpop.f32.mrb[0].mxu0
    %515 = vmatprep.mubr.f32.mxu0 0.0
    %516 = vmatmul.mubr.f32.gmra.mrb[0].mxu0 %v420
    %v517 = vpop.f32.mrb[0].mxu0
    %v518 = vadd.f32 %v404, %v517
    %v519 = vpop.f32.mrb[0].mxu0
    %520 = vmatprep.mubr.f32.mxu0 0.0
    %521 = vmatmul.mubr.f32.gmra.mrb[0].mxu0 %v423
    %v522 = vpop.f32.mrb[0].mxu0
    %v523 = vadd.f32 %v404, %v522
    %v524 = vpop.f32.mrb[0].mxu0
    %525 = vmatprep.mubr.f32.mxu0 0.0
    %526 = vmatmul.mubr.f32.gmra.mrb[0].mxu0 %v426
    %v527 = vpop.f32.mrb[0].mxu0
    %v528 = vadd.f32 %v404, %v527
    %v529 = vpop.f32.mrb[0].mxu0
    %530 = vmatprep.mubr.f32.mxu0 0.0
    %531 = vmatmul.mubr.f32.gmra.mrb[0].mxu0 %v429
    %v532 = vpop.f32.mrb[0].mxu0
    %v533 = vadd.f32 %v404, %v532
    %v534 = vpop.f32.mrb[0].mxu0
    %535 = vdwg.mxu0
    %v536 = vmax.f32 %v498, 0.0
    %v537 = vmax.f32 %v503, 0.0
    %v538 = vmax.f32 %v508, 0.0
    %v539 = vmax.f32 %v513, 0.0
    %v540 = vmax.f32 %v518, 0.0
    %v541 = vmax.f32 %v523, 0.0
    %v542 = vmax.f32 %v528, 0.0
    %v543 = vmax.f32 %v533, 0.0
    %s544 = scalar_lea.vmem [#allocation4], 32
    %v545 = vld [vmem:[%s544] sm:$0xff]
    %v546 = vld [vmem:[%s544 + $0x8] sm:$0xff]
    %v547 = vld [vmem:[%s544 + $0x10] sm:$0xff]
    %v548 = vld [vmem:[%s544 + $0x18] sm:$0xff]
    %v550 = vsel %vm269, %v536, 0
    %v553 = vsel %vm269, %v537, 0
    %v556 = vsel %vm269, %v538, 0
    %v559 = vsel %vm269, %v539, 0
    %v562 = vsel %vm269, %v540, 0
    %v565 = vsel %vm269, %v541, 0
    %v568 = vsel %vm269, %v542, 0
    %v571 = vsel %vm269, %v543, 0
    %573 = vmatprep.subr.mxu0 0.0
    %574 = vmatpush1.msra.mxu0 %v545
    %575 = vmatprep.subr.mxu0 0.0
    %576 = vmatpush1.msra.mxu0 %v546
    %577 = vmatprep.subr.mxu0 0.0
    %578 = vmatpush1.msra.mxu0 %v547
    %579 = vmatprep.subr.mxu0 0.0
    %580 = vmatpush1.msra.mxu0 %v548
    %581 = vmatprep.subr.mxu0 0.0
    %582 = vmatpush1.msra.mxu0 0.0
    %583 = vmatprep.subr.mxu0 0.0
    %584 = vmatpush1.msra.mxu0 0.0
    %585 = vmatprep.subr.mxu0 0.0
    %586 = vmatpush1.msra.mxu0 0.0
    %587 = vmatprep.subr.mxu0 0.0
    %588 = vmatpush1.msra.mxu0 0.0
    %589 = vmatprep.subr.mxu0 0.0
    %590 = vmatpush1.msra.mxu0 0.0
    %591 = vmatprep.subr.mxu0 0.0
    %592 = vmatpush1.msra.mxu0 0.0
    %593 = vmatprep.subr.mxu0 0.0
    %594 = vmatpush1.msra.mxu0 0.0
    %595 = vmatprep.subr.mxu0 0.0
    %596 = vmatpush1.msra.mxu0 0.0
    %597 = vmatprep.subr.mxu0 0.0
    %598 = vmatpush1.msra.mxu0 0.0
    %599 = vmatprep.subr.mxu0 0.0
    %600 = vmatpush1.msra.mxu0 0.0
    %601 = vmatprep.subr.mxu0 0.0
    %602 = vmatpush1.msra.mxu0 0.0
    %603 = vmatprep.subr.mxu0 0.0
    %604 = vmatpush1.msra.mxu0 0.0
    %605 = vmatprep.subr.mxu0 0.0
    %606 = vmatpush1.msra.mxu0 0.0
    %607 = vmatprep.subr.mxu0 0.0
    %608 = vmatpush1.msra.mxu0 0.0
    %609 = vmatprep.subr.mxu0 0.0
    %610 = vmatpush1.msra.mxu0 0.0
    %611 = vmatprep.subr.mxu0 0.0
    %612 = vmatpush1.msra.mxu0 0.0
    %613 = vmatprep.subr.mxu0 0.0
    %614 = vmatpush1.msra.mxu0 0.0
    %615 = vmatprep.subr.mxu0 0.0
    %616 = vmatpush1.msra.mxu0 0.0
    %617 = vmatprep.subr.mxu0 0.0
    %618 = vmatpush1.msra.mxu0 0.0
    %619 = vmatprep.subr.mxu0 0.0
    %620 = vmatpush1.msra.mxu0 0.0
    %621 = vmatprep.subr.mxu0 0.0
    %622 = vmatpush1.msra.mxu0 0.0
    %623 = vmatprep.subr.mxu0 0.0
    %624 = vmatpush1.msra.mxu0 0.0
    %625 = vmatprep.subr.mxu0 0.0
    %626 = vmatpush1.msra.mxu0 0.0
    %627 = vmatprep.subr.mxu0 0.0
    %628 = vmatpush1.msra.mxu0 0.0
    %629 = vmatprep.subr.mxu0 0.0
    %630 = vmatpush1.msra.mxu0 0.0
    %631 = vmatprep.subr.mxu0 0.0
    %632 = vmatpush1.msra.mxu0 0.0
    %633 = vmatprep.subr.mxu0 0.0
    %634 = vmatpush1.msra.mxu0 0.0
    %635 = vmatprep.subr.mxu0 0.0
    %636 = vmatpush1.msra.mxu0 0.0
    %637 = vmatprep.mubr.f32.mxu0 0.0
    %638 = vmatmul.mubr.f32.gmra.mrb[0].mxu0 %v550
    %v639 = vpop.f32.mrb[0].mxu0
    %v640 = vadd.f32 0.0, %v639
    %v641 = vpop.f32.mrb[0].mxu0
    %642 = vmatprep.mubr.f32.mxu0 0.0
    %643 = vmatmul.mubr.f32.gmra.mrb[0].mxu0 %v553
    %v644 = vpop.f32.mrb[0].mxu0
    %v645 = vadd.f32 0.0, %v644
    %v646 = vpop.f32.mrb[0].mxu0
    %647 = vmatprep.mubr.f32.mxu0 0.0
    %648 = vmatmul.mubr.f32.gmra.mrb[0].mxu0 %v556
    %v649 = vpop.f32.mrb[0].mxu0
    %v650 = vadd.f32 0.0, %v649
    %v651 = vpop.f32.mrb[0].mxu0
    %652 = vmatprep.mubr.f32.mxu0 0.0
    %653 = vmatmul.mubr.f32.gmra.mrb[0].mxu0 %v559
    %v654 = vpop.f32.mrb[0].mxu0
    %v655 = vadd.f32 0.0, %v654
    %v656 = vpop.f32.mrb[0].mxu0
    %657 = vmatprep.mubr.f32.mxu0 0.0
    %658 = vmatmul.mubr.f32.gmra.mrb[0].mxu0 %v562
    %v659 = vpop.f32.mrb[0].mxu0
    %v660 = vadd.f32 0.0, %v659
    %v661 = vpop.f32.mrb[0].mxu0
    %662 = vmatprep.mubr.f32.mxu0 0.0
    %663 = vmatmul.mubr.f32.gmra.mrb[0].mxu0 %v565
    %v664 = vpop.f32.mrb[0].mxu0
    %v665 = vadd.f32 0.0, %v664
    %v666 = vpop.f32.mrb[0].mxu0
    %667 = vmatprep.mubr.f32.mxu0 0.0
    %668 = vmatmul.mubr.f32.gmra.mrb[0].mxu0 %v568
    %v669 = vpop.f32.mrb[0].mxu0
    %v670 = vadd.f32 0.0, %v669
    %v671 = vpop.f32.mrb[0].mxu0
    %672 = vmatprep.mubr.f32.mxu0 0.0
    %673 = vmatmul.mubr.f32.gmra.mrb[0].mxu0 %v571
    %v674 = vpop.f32.mrb[0].mxu0
    %v675 = vadd.f32 0.0, %v674
    %v676 = vpop.f32.mrb[0].mxu0
    %677 = vdwg.mxu0
    %s678 = scalar_lea.vmem [#allocation6], 1
    %v679 = vld [vmem:[%s678] sm:$0x1]
    %v681 = vlaneseq
    %v682 = vshrl.u32 %v681, 7
    %v683 = vsub.s32 0, %v682
    %v684 = vrot.slane %v679, %v683
    %686 = vmatprep.subr.mxu0 0.0
    %687 = vmatpush1.msra.mxu0 %v640
    %688 = vmatprep.subr.mxu0 0.0
    %689 = vmatpush1.msra.mxu0 %v645
    %690 = vmatprep.subr.mxu0 0.0
    %691 = vmatpush1.msra.mxu0 %v650
    %692 = vmatprep.subr.mxu0 0.0
    %693 = vmatpush1.msra.mxu0 %v655
    %694 = vmatprep.subr.mxu0 0.0
    %695 = vmatpush1.msra.mxu0 %v660
    %696 = vmatprep.subr.mxu0 0.0
    %697 = vmatpush1.msra.mxu0 %v665
    %698 = vmatprep.subr.mxu0 0.0
    %699 = vmatpush1.msra.mxu0 %v670
    %700 = vmatprep.subr.mxu0 0.0
    %701 = vmatpush1.msra.mxu0 %v675
    %702 = vmatprep.subr.mxu0 0.0
    %703 = vmatpush1.msra.mxu0 0.0
    %704 = vmatprep.subr.mxu0 0.0
    %705 = vmatpush1.msra.mxu0 0.0
    %706 = vmatprep.subr.mxu0 0.0
    %707 = vmatpush1.msra.mxu0 0.0
    %708 = vmatprep.subr.mxu0 0.0
    %709 = vmatpush1.msra.mxu0 0.0
    %710 = vmatprep.subr.mxu0 0.0
    %711 = vmatpush1.msra.mxu0 0.0
    %712 = vmatprep.subr.mxu0 0.0
    %713 = vmatpush1.msra.mxu0 0.0
    %714 = vmatprep.subr.mxu0 0.0
    %715 = vmatpush1.msra.mxu0 0.0
    %716 = vmatprep.subr.mxu0 0.0
    %717 = vmatpush1.msra.mxu0 0.0
    %718 = vmatprep.subr.mxu0 0.0
    %719 = vmatpush1.msra.mxu0 0.0
    %720 = vmatprep.subr.mxu0 0.0
    %721 = vmatpush1.msra.mxu0 0.0
    %722 = vmatprep.subr.mxu0 0.0
    %723 = vmatpush1.msra.mxu0 0.0
    %724 = vmatprep.subr.mxu0 0.0
    %725 = vmatpush1.msra.mxu0 0.0
    %726 = vmatprep.subr.mxu0 0.0
    %727 = vmatpush1.msra.mxu0 0.0
    %728 = vmatprep.subr.mxu0 0.0
    %729 = vmatpush1.msra.mxu0 0.0
    %730 = vmatprep.subr.mxu0 0.0
    %731 = vmatpush1.msra.mxu0 0.0
    %732 = vmatprep.subr.mxu0 0.0
    %733 = vmatpush1.msra.mxu0 0.0
    %734 = vmatprep.subr.mxu0 0.0
    %735 = vmatpush1.msra.mxu0 0.0
    %736 = vmatprep.subr.mxu0 0.0
    %737 = vmatpush1.msra.mxu0 0.0
    %738 = vmatprep.subr.mxu0 0.0
    %739 = vmatpush1.msra.mxu0 0.0
    %740 = vmatprep.subr.mxu0 0.0
    %741 = vmatpush1.msra.mxu0 0.0
    %742 = vmatprep.subr.mxu0 0.0
    %743 = vmatpush1.msra.mxu0 0.0
    %744 = vmatprep.subr.mxu0 0.0
    %745 = vmatpush1.msra.mxu0 0.0
    %746 = vmatprep.subr.mxu0 0.0
    %747 = vmatpush1.msra.mxu0 0.0
    %748 = vmatprep.subr.mxu0 0.0
    %749 = vmatpush1.msra.mxu0 0.0
    %750 = vmatprep.mubr.f32.mxu0 0.0
    %751 = vmatmul.mubr.f32.gmra.mrb[0].mxu0 %v408
    %v752 = vpop.f32.mrb[0].mxu0
    %v753 = vadd.f32 %v684, %v752
    %v754 = vpop.f32.mrb[0].mxu0
    %755 = vmatprep.mubr.f32.mxu0 0.0
    %756 = vmatmul.mubr.f32.gmra.mrb[0].mxu0 %v411
    %v757 = vpop.f32.mrb[0].mxu0
    %v758 = vadd.f32 %v684, %v757
    %v759 = vpop.f32.mrb[0].mxu0
    %760 = vmatprep.mubr.f32.mxu0 0.0
    %761 = vmatmul.mubr.f32.gmra.mrb[0].mxu0 %v414
    %v762 = vpop.f32.mrb[0].mxu0
    %v763 = vadd.f32 %v684, %v762
    %v764 = vpop.f32.mrb[0].mxu0
    %765 = vmatprep.mubr.f32.mxu0 0.0
    %766 = vmatmul.mubr.f32.gmra.mrb[0].mxu0 %v417
    %v767 = vpop.f32.mrb[0].mxu0
    %v768 = vadd.f32 %v684, %v767
    %v769 = vpop.f32.mrb[0].mxu0
    %770 = vmatprep.mubr.f32.mxu0 0.0
    %771 = vmatmul.mubr.f32.gmra.mrb[0].mxu0 %v420
    %v772 = vpop.f32.mrb[0].mxu0
    %v773 = vadd.f32 %v684, %v772
    %v774 = vpop.f32.mrb[0].mxu0
    %775 = vmatprep.mubr.f32.mxu0 0.0
    %776 = vmatmul.mubr.f32.gmra.mrb[0].mxu0 %v423
    %v777 = vpop.f32.mrb[0].mxu0
    %v778 = vadd.f32 %v684, %v777
    %v779 = vpop.f32.mrb[0].mxu0
    %780 = vmatprep.mubr.f32.mxu0 0.0
    %781 = vmatmul.mubr.f32.gmra.mrb[0].mxu0 %v426
    %v782 = vpop.f32.mrb[0].mxu0
    %v783 = vadd.f32 %v684, %v782
    %v784 = vpop.f32.mrb[0].mxu0
    %785 = vmatprep.mubr.f32.mxu0 0.0
    %786 = vmatmul.mubr.f32.gmra.mrb[0].mxu0 %v429
    %v787 = vpop.f32.mrb[0].mxu0
    %v788 = vadd.f32 %v684, %v787
    %v789 = vpop.f32.mrb[0].mxu0
    %790 = vdwg.mxu0
    %v791 = vmax.f32 %v753, 0.0
    %v792 = vmax.f32 %v758, 0.0
    %v793 = vmax.f32 %v763, 0.0
    %v794 = vmax.f32 %v768, 0.0
    %v795 = vmax.f32 %v773, 0.0
    %v796 = vmax.f32 %v778, 0.0
    %v797 = vmax.f32 %v783, 0.0
    %v798 = vmax.f32 %v788, 0.0
    %v799 = vld [vmem:[%s7] sm:$0xff]
    %v800 = vld [vmem:[%s7 + $0x8] sm:$0xff]
    %v801 = vld [vmem:[%s7 + $0x10] sm:$0xff]
    %v802 = vld [vmem:[%s7 + $0x18] sm:$0xff]
    %v803 = vld [vmem:[#allocation7] sm:$0x1]
    %v805 = vlaneseq
    %v806 = vshrl.u32 %v805, 7
    %v807 = vsub.s32 0, %v806
    %v808 = vrot.slane %v803, %v807
    %v811 = vsel %vm269, %v791, 0
    %v814 = vsel %vm269, %v792, 0
    %v817 = vsel %vm269, %v793, 0
    %v820 = vsel %vm269, %v794, 0
    %v823 = vsel %vm269, %v795, 0
    %v826 = vsel %vm269, %v796, 0
    %v829 = vsel %vm269, %v797, 0
    %v832 = vsel %vm269, %v798, 0
    %834 = vmatprep.subr.mxu0 0.0
    %835 = vmatpush1.msra.mxu0 %v799
    %836 = vmatprep.subr.mxu0 0.0
    %837 = vmatpush1.msra.mxu0 %v800
    %838 = vmatprep.subr.mxu0 0.0
    %839 = vmatpush1.msra.mxu0 %v801
    %840 = vmatprep.subr.mxu0 0.0
    %841 = vmatpush1.msra.mxu0 %v802
    %842 = vmatprep.subr.mxu0 0.0
    %843 = vmatpush1.msra.mxu0 0.0
    %844 = vmatprep.subr.mxu0 0.0
    %845 = vmatpush1.msra.mxu0 0.0
    %846 = vmatprep.subr.mxu0 0.0
    %847 = vmatpush1.msra.mxu0 0.0
    %848 = vmatprep.subr.mxu0 0.0
    %849 = vmatpush1.msra.mxu0 0.0
    %850 = vmatprep.subr.mxu0 0.0
    %851 = vmatpush1.msra.mxu0 0.0
    %852 = vmatprep.subr.mxu0 0.0
    %853 = vmatpush1.msra.mxu0 0.0
    %854 = vmatprep.subr.mxu0 0.0
    %855 = vmatpush1.msra.mxu0 0.0
    %856 = vmatprep.subr.mxu0 0.0
    %857 = vmatpush1.msra.mxu0 0.0
    %858 = vmatprep.subr.mxu0 0.0
    %859 = vmatpush1.msra.mxu0 0.0
    %860 = vmatprep.subr.mxu0 0.0
    %861 = vmatpush1.msra.mxu0 0.0
    %862 = vmatprep.subr.mxu0 0.0
    %863 = vmatpush1.msra.mxu0 0.0
    %864 = vmatprep.subr.mxu0 0.0
    %865 = vmatpush1.msra.mxu0 0.0
    %866 = vmatprep.subr.mxu0 0.0
    %867 = vmatpush1.msra.mxu0 0.0
    %868 = vmatprep.subr.mxu0 0.0
    %869 = vmatpush1.msra.mxu0 0.0
    %870 = vmatprep.subr.mxu0 0.0
    %871 = vmatpush1.msra.mxu0 0.0
    %872 = vmatprep.subr.mxu0 0.0
    %873 = vmatpush1.msra.mxu0 0.0
    %874 = vmatprep.subr.mxu0 0.0
    %875 = vmatpush1.msra.mxu0 0.0
    %876 = vmatprep.subr.mxu0 0.0
    %877 = vmatpush1.msra.mxu0 0.0
    %878 = vmatprep.subr.mxu0 0.0
    %879 = vmatpush1.msra.mxu0 0.0
    %880 = vmatprep.subr.mxu0 0.0
    %881 = vmatpush1.msra.mxu0 0.0
    %882 = vmatprep.subr.mxu0 0.0
    %883 = vmatpush1.msra.mxu0 0.0
    %884 = vmatprep.subr.mxu0 0.0
    %885 = vmatpush1.msra.mxu0 0.0
    %886 = vmatprep.subr.mxu0 0.0
    %887 = vmatpush1.msra.mxu0 0.0
    %888 = vmatprep.subr.mxu0 0.0
    %889 = vmatpush1.msra.mxu0 0.0
    %890 = vmatprep.subr.mxu0 0.0
    %891 = vmatpush1.msra.mxu0 0.0
    %892 = vmatprep.subr.mxu0 0.0
    %893 = vmatpush1.msra.mxu0 0.0
    %894 = vmatprep.subr.mxu0 0.0
    %895 = vmatpush1.msra.mxu0 0.0
    %896 = vmatprep.subr.mxu0 0.0
    %897 = vmatpush1.msra.mxu0 0.0
    %898 = vmatprep.mubr.f32.mxu0 0.0
    %899 = vmatmul.mubr.f32.gmra.mrb[0].mxu0 %v811
    %v900 = vpop.f32.mrb[0].mxu0
    %v901 = vadd.f32 %v808, %v900
    %v902 = vpop.f32.mrb[0].mxu0
    %903 = vmatprep.mubr.f32.mxu0 0.0
    %904 = vmatmul.mubr.f32.gmra.mrb[0].mxu0 %v814
    %v905 = vpop.f32.mrb[0].mxu0
    %v906 = vadd.f32 %v808, %v905
    %v907 = vpop.f32.mrb[0].mxu0
    %908 = vmatprep.mubr.f32.mxu0 0.0
    %909 = vmatmul.mubr.f32.gmra.mrb[0].mxu0 %v817
    %v910 = vpop.f32.mrb[0].mxu0
    %v911 = vadd.f32 %v808, %v910
    %v912 = vpop.f32.mrb[0].mxu0
    %913 = vmatprep.mubr.f32.mxu0 0.0
    %914 = vmatmul.mubr.f32.gmra.mrb[0].mxu0 %v820
    %v915 = vpop.f32.mrb[0].mxu0
    %v916 = vadd.f32 %v808, %v915
    %v917 = vpop.f32.mrb[0].mxu0
    %918 = vmatprep.mubr.f32.mxu0 0.0
    %919 = vmatmul.mubr.f32.gmra.mrb[0].mxu0 %v823
    %v920 = vpop.f32.mrb[0].mxu0
    %v921 = vadd.f32 %v808, %v920
    %v922 = vpop.f32.mrb[0].mxu0
    %923 = vmatprep.mubr.f32.mxu0 0.0
    %924 = vmatmul.mubr.f32.gmra.mrb[0].mxu0 %v826
    %v925 = vpop.f32.mrb[0].mxu0
    %v926 = vadd.f32 %v808, %v925
    %v927 = vpop.f32.mrb[0].mxu0
    %928 = vmatprep.mubr.f32.mxu0 0.0
    %929 = vmatmul.mubr.f32.gmra.mrb[0].mxu0 %v829
    %v930 = vpop.f32.mrb[0].mxu0
    %v931 = vadd.f32 %v808, %v930
    %v932 = vpop.f32.mrb[0].mxu0
    %933 = vmatprep.mubr.f32.mxu0 0.0
    %934 = vmatmul.mubr.f32.gmra.mrb[0].mxu0 %v832
    %v935 = vpop.f32.mrb[0].mxu0
    %v936 = vadd.f32 %v808, %v935
    %v937 = vpop.f32.mrb[0].mxu0
    %938 = vdwg.mxu0
    %v939 = vmul.f32 %v901, %v901
    %v940 = vmul.f32 %v906, %v906
    %v941 = vmul.f32 %v911, %v911
    %v942 = vmul.f32 %v916, %v916
    %v943 = vmul.f32 %v921, %v921
    %v944 = vmul.f32 %v926, %v926
    %v945 = vmul.f32 %v931, %v931
    %v946 = vmul.f32 %v936, %v936
    %v947 = vsel %vm269, %v939, 0.0
    %948 = vadd.xlane.f32.xlu0 %v947
    %v949 = vpop.xlane.xlu0 %948
    %v950 = vsel %vm269, %v940, 0.0
    %951 = vadd.xlane.f32.xlu0 %v950
    %v952 = vpop.xlane.xlu0 %951
    %v953 = vsel %vm269, %v941, 0.0
    %954 = vadd.xlane.f32.xlu0 %v953
    %v955 = vpop.xlane.xlu0 %954
    %v956 = vsel %vm269, %v942, 0.0
    %957 = vadd.xlane.f32.xlu0 %v956
    %v958 = vpop.xlane.xlu0 %957
    %v959 = vsel %vm269, %v943, 0.0
    %960 = vadd.xlane.f32.xlu0 %v959
    %v961 = vpop.xlane.xlu0 %960
    %v962 = vsel %vm269, %v944, 0.0
    %963 = vadd.xlane.f32.xlu0 %v962
    %v964 = vpop.xlane.xlu0 %963
    %v965 = vsel %vm269, %v945, 0.0
    %966 = vadd.xlane.f32.xlu0 %v965
    %v967 = vpop.xlane.xlu0 %966
    %v968 = vsel %vm269, %v946, 0.0
    %969 = vadd.xlane.f32.xlu0 %v968
    %v970 = vpop.xlane.xlu0 %969
    %v971 = vmax.f32 %v949, 1e-24
    %v972 = vmax.f32 %v952, 1e-24
    %v973 = vmax.f32 %v955, 1e-24
    %v974 = vmax.f32 %v958, 1e-24
    %v975 = vmax.f32 %v961, 1e-24
    %v976 = vmax.f32 %v964, 1e-24
    %v977 = vmax.f32 %v967, 1e-24
    %v978 = vmax.f32 %v970, 1e-24
    %v979 = vrsqrt.pop %v971
    %v980 = vrsqrt.pop %v972
    %v981 = vrsqrt.pop %v973
    %v982 = vrsqrt.pop %v974
    %v983 = vrsqrt.pop %v975
    %v984 = vrsqrt.pop %v976
    %v985 = vrsqrt.pop %v977
    %v986 = vrsqrt.pop %v978
    %v987 = vmul.f32 %v901, %v979
    %v988 = vmul.f32 %v906, %v980
    %v989 = vmul.f32 %v911, %v981
    %v990 = vmul.f32 %v916, %v982
    %v991 = vmul.f32 %v921, %v983
    %v992 = vmul.f32 %v926, %v984
    %v993 = vmul.f32 %v931, %v985
    %v994 = vmul.f32 %v936, %v986
    %v995 = vlaneseq
    %v996 = vand.u32 %v995, 127
    %v997 = vld [vmem:[%s0] sm:$0xff]
    %v998 = vld [vmem:[%s0 + $0x8] sm:$0xff]
    %v999 = vld [vmem:[%s0 + $0x10] sm:$0xff]
    %v1000 = vld [vmem:[%s0 + $0x18] sm:$0xff]
    %v1001 = vld [vmem:[%s0 + $0x20] sm:$0xff]
    %v1002 = vld [vmem:[%s0 + $0x28] sm:$0xff]
    %v1003 = vld [vmem:[%s0 + $0x30] sm:$0xff]
    %v1004 = vld [vmem:[%s0 + $0x38] sm:$0xff]
    %v1005 = vld [vmem:[%s0 + $0x40] sm:$0xff]
    %v1006 = vld [vmem:[%s0 + $0x48] sm:$0xff]
    %v1007 = vld [vmem:[%s0 + $0x50] sm:$0xff]
    %v1008 = vld [vmem:[%s0 + $0x58] sm:$0xff]
    %v1009 = vld [vmem:[%s0 + $0x60] sm:$0xff]
    %v1010 = vld [vmem:[%s0 + $0x68] sm:$0xff]
    %v1011 = vld [vmem:[%s0 + $0x70] sm:$0xff]
    %v1012 = vld [vmem:[%s0 + $0x78] sm:$0xff]
    %1013 = vset.pattern.permute.xlu0 0
    %1014 = vperm.xlu0 %1013, %v997
    %v1015 = vpop.permute.xlu0 %1014
    %1016 = vset.pattern.permute.xlu0 0
    %1017 = vperm.xlu0 %1016, %v998
    %v1018 = vpop.permute.xlu0 %1017
    %1019 = vset.pattern.permute.xlu0 0
    %1020 = vperm.xlu0 %1019, %v999
    %v1021 = vpop.permute.xlu0 %1020
    %1022 = vset.pattern.permute.xlu0 0
    %1023 = vperm.xlu0 %1022, %v1000
    %v1024 = vpop.permute.xlu0 %1023
    %1025 = vset.pattern.permute.xlu0 0
    %1026 = vperm.xlu0 %1025, %v1001
    %v1027 = vpop.permute.xlu0 %1026
    %1028 = vset.pattern.permute.xlu0 0
    %1029 = vperm.xlu0 %1028, %v1002
    %v1030 = vpop.permute.xlu0 %1029
    %1031 = vset.pattern.permute.xlu0 0
    %1032 = vperm.xlu0 %1031, %v1003
    %v1033 = vpop.permute.xlu0 %1032
    %1034 = vset.pattern.permute.xlu0 0
    %1035 = vperm.xlu0 %1034, %v1004
    %v1036 = vpop.permute.xlu0 %1035
    %1037 = vset.pattern.permute.xlu0 0
    %1038 = vperm.xlu0 %1037, %v1005
    %v1039 = vpop.permute.xlu0 %1038
    %1040 = vset.pattern.permute.xlu0 0
    %1041 = vperm.xlu0 %1040, %v1006
    %v1042 = vpop.permute.xlu0 %1041
    %1043 = vset.pattern.permute.xlu0 0
    %1044 = vperm.xlu0 %1043, %v1007
    %v1045 = vpop.permute.xlu0 %1044
    %1046 = vset.pattern.permute.xlu0 0
    %1047 = vperm.xlu0 %1046, %v1008
    %v1048 = vpop.permute.xlu0 %1047
    %1049 = vset.pattern.permute.xlu0 0
    %1050 = vperm.xlu0 %1049, %v1009
    %v1051 = vpop.permute.xlu0 %1050
    %1052 = vset.pattern.permute.xlu0 0
    %1053 = vperm.xlu0 %1052, %v1010
    %v1054 = vpop.permute.xlu0 %1053
    %1055 = vset.pattern.permute.xlu0 0
    %1056 = vperm.xlu0 %1055, %v1011
    %v1057 = vpop.permute.xlu0 %1056
    %1058 = vset.pattern.permute.xlu0 0
    %1059 = vperm.xlu0 %1058, %v1012
    %v1060 = vpop.permute.xlu0 %1059
    %vm1061 = vcmp.eq.s32.totalorder %v996, %v1015
    %vm1062 = vcmp.eq.s32.totalorder %v996, %v1018
    %vm1063 = vcmp.eq.s32.totalorder %v996, %v1021
    %vm1064 = vcmp.eq.s32.totalorder %v996, %v1024
    %vm1065 = vcmp.eq.s32.totalorder %v996, %v1027
    %vm1066 = vcmp.eq.s32.totalorder %v996, %v1030
    %vm1067 = vcmp.eq.s32.totalorder %v996, %v1033
    %vm1068 = vcmp.eq.s32.totalorder %v996, %v1036
    %vm1069 = vcmp.eq.s32.totalorder %v996, %v1039
    %vm1070 = vcmp.eq.s32.totalorder %v996, %v1042
    %vm1071 = vcmp.eq.s32.totalorder %v996, %v1045
    %vm1072 = vcmp.eq.s32.totalorder %v996, %v1048
    %vm1073 = vcmp.eq.s32.totalorder %v996, %v1051
    %vm1074 = vcmp.eq.s32.totalorder %v996, %v1054
    %vm1075 = vcmp.eq.s32.totalorder %v996, %v1057
    %vm1076 = vcmp.eq.s32.totalorder %v996, %v1060
    %v1077 = vsel %vm1061, 1, 0
    %v1078 = vsel %vm1062, 1, 0
    %v1079 = vsel %vm1063, 1, 0
    %v1080 = vsel %vm1064, 1, 0
    %v1081 = vsel %vm1065, 1, 0
    %v1082 = vsel %vm1066, 1, 0
    %v1083 = vsel %vm1067, 1, 0
    %v1084 = vsel %vm1068, 1, 0
    %v1085 = vsel %vm1069, 1, 0
    %v1086 = vsel %vm1070, 1, 0
    %v1087 = vsel %vm1071, 1, 0
    %v1088 = vsel %vm1072, 1, 0
    %v1089 = vsel %vm1073, 1, 0
    %v1090 = vsel %vm1074, 1, 0
    %v1091 = vsel %vm1075, 1, 0
    %v1092 = vsel %vm1076, 1, 0
    %v1093 = vcvt.s32.f32 %v1077
    %v1094 = vcvt.s32.f32 %v1078
    %v1095 = vcvt.s32.f32 %v1079
    %v1096 = vcvt.s32.f32 %v1080
    %v1097 = vcvt.s32.f32 %v1081
    %v1098 = vcvt.s32.f32 %v1082
    %v1099 = vcvt.s32.f32 %v1083
    %v1100 = vcvt.s32.f32 %v1084
    %v1101 = vcvt.s32.f32 %v1085
    %v1102 = vcvt.s32.f32 %v1086
    %v1103 = vcvt.s32.f32 %v1087
    %v1104 = vcvt.s32.f32 %v1088
    %v1105 = vcvt.s32.f32 %v1089
    %v1106 = vcvt.s32.f32 %v1090
    %v1107 = vcvt.s32.f32 %v1091
    %v1108 = vcvt.s32.f32 %v1092
    %v1110 = vsel %vm406, %v1093, 0
    %v1113 = vsel %vm406, %v1094, 0
    %v1116 = vsel %vm406, %v1095, 0
    %v1119 = vsel %vm406, %v1096, 0
    %v1122 = vsel %vm406, %v1097, 0
    %v1125 = vsel %vm406, %v1098, 0
    %v1128 = vsel %vm406, %v1099, 0
    %v1131 = vsel %vm406, %v1100, 0
    %v1134 = vsel %vm406, %v1101, 0
    %v1137 = vsel %vm406, %v1102, 0
    %v1140 = vsel %vm406, %v1103, 0
    %v1143 = vsel %vm406, %v1104, 0
    %v1146 = vsel %vm406, %v1105, 0
    %v1149 = vsel %vm406, %v1106, 0
    %v1152 = vsel %vm406, %v1107, 0
    %v1155 = vsel %vm406, %v1108, 0
    %1157 = vmatprep.subr.mxu0 0.0
    %1158 = vmatpush1.msra.mxu0 %v987
    %1159 = vmatprep.subr.mxu0 0.0
    %1160 = vmatpush1.msra.mxu0 %v988
    %1161 = vmatprep.subr.mxu0 0.0
    %1162 = vmatpush1.msra.mxu0 %v989
    %1163 = vmatprep.subr.mxu0 0.0
    %1164 = vmatpush1.msra.mxu0 %v990
    %1165 = vmatprep.subr.mxu0 0.0
    %1166 = vmatpush1.msra.mxu0 %v991
    %1167 = vmatprep.subr.mxu0 0.0
    %1168 = vmatpush1.msra.mxu0 %v992
    %1169 = vmatprep.subr.mxu0 0.0
    %1170 = vmatpush1.msra.mxu0 %v993
    %1171 = vmatprep.subr.mxu0 0.0
    %1172 = vmatpush1.msra.mxu0 %v994
    %1173 = vmatprep.subr.mxu0 0.0
    %1174 = vmatpush1.msra.mxu0 0.0
    %1175 = vmatprep.subr.mxu0 0.0
    %1176 = vmatpush1.msra.mxu0 0.0
    %1177 = vmatprep.subr.mxu0 0.0
    %1178 = vmatpush1.msra.mxu0 0.0
    %1179 = vmatprep.subr.mxu0 0.0
    %1180 = vmatpush1.msra.mxu0 0.0
    %1181 = vmatprep.subr.mxu0 0.0
    %1182 = vmatpush1.msra.mxu0 0.0
    %1183 = vmatprep.subr.mxu0 0.0
    %1184 = vmatpush1.msra.mxu0 0.0
    %1185 = vmatprep.subr.mxu0 0.0
    %1186 = vmatpush1.msra.mxu0 0.0
    %1187 = vmatprep.subr.mxu0 0.0
    %1188 = vmatpush1.msra.mxu0 0.0
    %1189 = vmatprep.subr.mxu0 0.0
    %1190 = vmatpush1.msra.mxu0 0.0
    %1191 = vmatprep.subr.mxu0 0.0
    %1192 = vmatpush1.msra.mxu0 0.0
    %1193 = vmatprep.subr.mxu0 0.0
    %1194 = vmatpush1.msra.mxu0 0.0
    %1195 = vmatprep.subr.mxu0 0.0
    %1196 = vmatpush1.msra.mxu0 0.0
    %1197 = vmatprep.subr.mxu0 0.0
    %1198 = vmatpush1.msra.mxu0 0.0
    %1199 = vmatprep.subr.mxu0 0.0
    %1200 = vmatpush1.msra.mxu0 0.0
    %1201 = vmatprep.subr.mxu0 0.0
    %1202 = vmatpush1.msra.mxu0 0.0
    %1203 = vmatprep.subr.mxu0 0.0
    %1204 = vmatpush1.msra.mxu0 0.0
    %1205 = vmatprep.subr.mxu0 0.0
    %1206 = vmatpush1.msra.mxu0 0.0
    %1207 = vmatprep.subr.mxu0 0.0
    %1208 = vmatpush1.msra.mxu0 0.0
    %1209 = vmatprep.subr.mxu0 0.0
    %1210 = vmatpush1.msra.mxu0 0.0
    %1211 = vmatprep.subr.mxu0 0.0
    %1212 = vmatpush1.msra.mxu0 0.0
    %1213 = vmatprep.subr.mxu0 0.0
    %1214 = vmatpush1.msra.mxu0 0.0
    %1215 = vmatprep.subr.mxu0 0.0
    %1216 = vmatpush1.msra.mxu0 0.0
    %1217 = vmatprep.subr.mxu0 0.0
    %1218 = vmatpush1.msra.mxu0 0.0
    %1219 = vmatprep.subr.mxu0 0.0
    %1220 = vmatpush1.msra.mxu0 0.0
    %1221 = vmatprep.mubr.f32.mxu0 0.0
    %1222 = vmatmul.mubr.f32.gmra.mrb[0].mxu0 %v1110
    %v1223 = vpop.f32.mrb[0].mxu0
    %v1224 = vadd.f32 0.0, %v1223
    %v1225 = vpop.f32.mrb[0].mxu0
    %1226 = vmatprep.mubr.f32.mxu0 0.0
    %1227 = vmatmul.mubr.f32.gmra.mrb[0].mxu0 %v1113
    %v1228 = vpop.f32.mrb[0].mxu0
    %v1229 = vadd.f32 0.0, %v1228
    %v1230 = vpop.f32.mrb[0].mxu0
    %1231 = vmatprep.mubr.f32.mxu0 0.0
    %1232 = vmatmul.mubr.f32.gmra.mrb[0].mxu0 %v1116
    %v1233 = vpop.f32.mrb[0].mxu0
    %v1234 = vadd.f32 0.0, %v1233
    %v1235 = vpop.f32.mrb[0].mxu0
    %1236 = vmatprep.mubr.f32.mxu0 0.0
    %1237 = vmatmul.mubr.f32.gmra.mrb[0].mxu0 %v1119
    %v1238 = vpop.f32.mrb[0].mxu0
    %v1239 = vadd.f32 0.0, %v1238
    %v1240 = vpop.f32.mrb[0].mxu0
    %1241 = vmatprep.mubr.f32.mxu0 0.0
    %1242 = vmatmul.mubr.f32.gmra.mrb[0].mxu0 %v1122
    %v1243 = vpop.f32.mrb[0].mxu0
    %v1244 = vadd.f32 0.0, %v1243
    %v1245 = vpop.f32.mrb[0].mxu0
    %1246 = vmatprep.mubr.f32.mxu0 0.0
    %1247 = vmatmul.mubr.f32.gmra.mrb[0].mxu0 %v1125
    %v1248 = vpop.f32.mrb[0].mxu0
    %v1249 = vadd.f32 0.0, %v1248
    %v1250 = vpop.f32.mrb[0].mxu0
    %1251 = vmatprep.mubr.f32.mxu0 0.0
    %1252 = vmatmul.mubr.f32.gmra.mrb[0].mxu0 %v1128
    %v1253 = vpop.f32.mrb[0].mxu0
    %v1254 = vadd.f32 0.0, %v1253
    %v1255 = vpop.f32.mrb[0].mxu0
    %1256 = vmatprep.mubr.f32.mxu0 0.0
    %1257 = vmatmul.mubr.f32.gmra.mrb[0].mxu0 %v1131
    %v1258 = vpop.f32.mrb[0].mxu0
    %v1259 = vadd.f32 0.0, %v1258
    %v1260 = vpop.f32.mrb[0].mxu0
    %1261 = vmatprep.mubr.f32.mxu0 0.0
    %1262 = vmatmul.mubr.f32.gmra.mrb[0].mxu0 %v1134
    %v1263 = vpop.f32.mrb[0].mxu0
    %v1264 = vadd.f32 0.0, %v1263
    %v1265 = vpop.f32.mrb[0].mxu0
    %1266 = vmatprep.mubr.f32.mxu0 0.0
    %1267 = vmatmul.mubr.f32.gmra.mrb[0].mxu0 %v1137
    %v1268 = vpop.f32.mrb[0].mxu0
    %v1269 = vadd.f32 0.0, %v1268
    %v1270 = vpop.f32.mrb[0].mxu0
    %1271 = vmatprep.mubr.f32.mxu0 0.0
    %1272 = vmatmul.mubr.f32.gmra.mrb[0].mxu0 %v1140
    %v1273 = vpop.f32.mrb[0].mxu0
    %v1274 = vadd.f32 0.0, %v1273
    %v1275 = vpop.f32.mrb[0].mxu0
    %1276 = vmatprep.mubr.f32.mxu0 0.0
    %1277 = vmatmul.mubr.f32.gmra.mrb[0].mxu0 %v1143
    %v1278 = vpop.f32.mrb[0].mxu0
    %v1279 = vadd.f32 0.0, %v1278
    %v1280 = vpop.f32.mrb[0].mxu0
    %1281 = vmatprep.mubr.f32.mxu0 0.0
    %1282 = vmatmul.mubr.f32.gmra.mrb[0].mxu0 %v1146
    %v1283 = vpop.f32.mrb[0].mxu0
    %v1284 = vadd.f32 0.0, %v1283
    %v1285 = vpop.f32.mrb[0].mxu0
    %1286 = vmatprep.mubr.f32.mxu0 0.0
    %1287 = vmatmul.mubr.f32.gmra.mrb[0].mxu0 %v1149
    %v1288 = vpop.f32.mrb[0].mxu0
    %v1289 = vadd.f32 0.0, %v1288
    %v1290 = vpop.f32.mrb[0].mxu0
    %1291 = vmatprep.mubr.f32.mxu0 0.0
    %1292 = vmatmul.mubr.f32.gmra.mrb[0].mxu0 %v1152
    %v1293 = vpop.f32.mrb[0].mxu0
    %v1294 = vadd.f32 0.0, %v1293
    %v1295 = vpop.f32.mrb[0].mxu0
    %1296 = vmatprep.mubr.f32.mxu0 0.0
    %1297 = vmatmul.mubr.f32.gmra.mrb[0].mxu0 %v1155
    %v1298 = vpop.f32.mrb[0].mxu0
    %v1299 = vadd.f32 0.0, %v1298
    %v1300 = vpop.f32.mrb[0].mxu0
    %1301 = vdwg.mxu0
    %v1303 = vsel %vm269, %v987, 0
    %v1306 = vsel %vm269, %v988, 0
    %v1309 = vsel %vm269, %v989, 0
    %v1312 = vsel %vm269, %v990, 0
    %v1315 = vsel %vm269, %v991, 0
    %v1318 = vsel %vm269, %v992, 0
    %v1321 = vsel %vm269, %v993, 0
    %v1324 = vsel %vm269, %v994, 0
    %v1327 = vsel %vm269, %v1224, 0
    %v1330 = vsel %vm269, %v1229, 0
    %v1333 = vsel %vm269, %v1234, 0
    %v1336 = vsel %vm269, %v1239, 0
    %v1339 = vsel %vm269, %v1244, 0
    %v1342 = vsel %vm269, %v1249, 0
    %v1345 = vsel %vm269, %v1254, 0
    %v1348 = vsel %vm269, %v1259, 0
    %v1351 = vsel %vm269, %v1264, 0
    %v1354 = vsel %vm269, %v1269, 0
    %v1357 = vsel %vm269, %v1274, 0
    %v1360 = vsel %vm269, %v1279, 0
    %v1363 = vsel %vm269, %v1284, 0
    %v1366 = vsel %vm269, %v1289, 0
    %v1369 = vsel %vm269, %v1294, 0
    %v1372 = vsel %vm269, %v1299, 0
    %1374 = vmatprep.subr.mxu0 0.0
    %1375 = vmatpush1.xpose.msra.mxu0 %v1327
    %1376 = vmatprep.subr.mxu0 0.0
    %1377 = vmatpush1.xpose.msra.mxu0 %v1330
    %1378 = vmatprep.subr.mxu0 0.0
    %1379 = vmatpush1.xpose.msra.mxu0 %v1333
    %1380 = vmatprep.subr.mxu0 0.0
    %1381 = vmatpush1.xpose.msra.mxu0 %v1336
    %1382 = vmatprep.subr.mxu0 0.0
    %1383 = vmatpush1.xpose.msra.mxu0 %v1339
    %1384 = vmatprep.subr.mxu0 0.0
    %1385 = vmatpush1.xpose.msra.mxu0 %v1342
    %1386 = vmatprep.subr.mxu0 0.0
    %1387 = vmatpush1.xpose.msra.mxu0 %v1345
    %1388 = vmatprep.subr.mxu0 0.0
    %1389 = vmatpush1.xpose.msra.mxu0 %v1348
    %1390 = vmatprep.subr.mxu0 0.0
    %1391 = vmatpush1.xpose.msra.mxu0 %v1351
    %1392 = vmatprep.subr.mxu0 0.0
    %1393 = vmatpush1.xpose.msra.mxu0 %v1354
    %1394 = vmatprep.subr.mxu0 0.0
    %1395 = vmatpush1.xpose.msra.mxu0 %v1357
    %1396 = vmatprep.subr.mxu0 0.0
    %1397 = vmatpush1.xpose.msra.mxu0 %v1360
    %1398 = vmatprep.subr.mxu0 0.0
    %1399 = vmatpush1.xpose.msra.mxu0 %v1363
    %1400 = vmatprep.subr.mxu0 0.0
    %1401 = vmatpush1.xpose.msra.mxu0 %v1366
    %1402 = vmatprep.subr.mxu0 0.0
    %1403 = vmatpush1.xpose.msra.mxu0 %v1369
    %1404 = vmatprep.subr.mxu0 0.0
    %1405 = vmatpush1.xpose.msra.mxu0 %v1372
    %1406 = vmatprep.subr.mxu0 0.0
    %1407 = vmatpush1.xpose.msra.mxu0 0.0
    %1408 = vmatprep.subr.mxu0 0.0
    %1409 = vmatpush1.xpose.msra.mxu0 0.0
    %1410 = vmatprep.subr.mxu0 0.0
    %1411 = vmatpush1.xpose.msra.mxu0 0.0
    %1412 = vmatprep.subr.mxu0 0.0
    %1413 = vmatpush1.xpose.msra.mxu0 0.0
    %1414 = vmatprep.subr.mxu0 0.0
    %1415 = vmatpush1.xpose.msra.mxu0 0.0
    %1416 = vmatprep.subr.mxu0 0.0
    %1417 = vmatpush1.xpose.msra.mxu0 0.0
    %1418 = vmatprep.subr.mxu0 0.0
    %1419 = vmatpush1.xpose.msra.mxu0 0.0
    %1420 = vmatprep.subr.mxu0 0.0
    %1421 = vmatpush1.xpose.msra.mxu0 0.0
    %1422 = vmatprep.subr.mxu0 0.0
    %1423 = vmatpush1.xpose.msra.mxu0 0.0
    %1424 = vmatprep.subr.mxu0 0.0
    %1425 = vmatpush1.xpose.msra.mxu0 0.0
    %1426 = vmatprep.subr.mxu0 0.0
    %1427 = vmatpush1.xpose.msra.mxu0 0.0
    %1428 = vmatprep.subr.mxu0 0.0
    %1429 = vmatpush1.xpose.msra.mxu0 0.0
    %1430 = vmatprep.subr.mxu0 0.0
    %1431 = vmatpush1.xpose.msra.mxu0 0.0
    %1432 = vmatprep.subr.mxu0 0.0
    %1433 = vmatpush1.xpose.msra.mxu0 0.0
    %1434 = vmatprep.subr.mxu0 0.0
    %1435 = vmatpush1.xpose.msra.mxu0 0.0
    %1436 = vmatprep.subr.mxu0 0.0
    %1437 = vmatpush1.xpose.msra.mxu0 0.0
    %1438 = vmatprep.mubr.f32.mxu0 0.0
    %1439 = vmatmul.mubr.f32.gmra.mrb[0].mxu0 %v1303
    %v1440 = vpop.f32.mrb[0].mxu0
    %v1441 = vadd.f32 0.0, %v1440
    %v1442 = vpop.f32.mrb[0].mxu0
    %1443 = vmatprep.mubr.f32.mxu0 0.0
    %1444 = vmatmul.mubr.f32.gmra.mrb[0].mxu0 %v1306
    %v1445 = vpop.f32.mrb[0].mxu0
    %v1446 = vadd.f32 0.0, %v1445
    %v1447 = vpop.f32.mrb[0].mxu0
    %1448 = vmatprep.mubr.f32.mxu0 0.0
    %1449 = vmatmul.mubr.f32.gmra.mrb[0].mxu0 %v1309
    %v1450 = vpop.f32.mrb[0].mxu0
    %v1451 = vadd.f32 0.0, %v1450
    %v1452 = vpop.f32.mrb[0].mxu0
    %1453 = vmatprep.mubr.f32.mxu0 0.0
    %1454 = vmatmul.mubr.f32.gmra.mrb[0].mxu0 %v1312
    %v1455 = vpop.f32.mrb[0].mxu0
    %v1456 = vadd.f32 0.0, %v1455
    %v1457 = vpop.f32.mrb[0].mxu0
    %1458 = vmatprep.mubr.f32.mxu0 0.0
    %1459 = vmatmul.mubr.f32.gmra.mrb[0].mxu0 %v1315
    %v1460 = vpop.f32.mrb[0].mxu0
    %v1461 = vadd.f32 0.0, %v1460
    %v1462 = vpop.f32.mrb[0].mxu0
    %1463 = vmatprep.mubr.f32.mxu0 0.0
    %1464 = vmatmul.mubr.f32.gmra.mrb[0].mxu0 %v1318
    %v1465 = vpop.f32.mrb[0].mxu0
    %v1466 = vadd.f32 0.0, %v1465
    %v1467 = vpop.f32.mrb[0].mxu0
    %1468 = vmatprep.mubr.f32.mxu0 0.0
    %1469 = vmatmul.mubr.f32.gmra.mrb[0].mxu0 %v1321
    %v1470 = vpop.f32.mrb[0].mxu0
    %v1471 = vadd.f32 0.0, %v1470
    %v1472 = vpop.f32.mrb[0].mxu0
    %1473 = vmatprep.mubr.f32.mxu0 0.0
    %1474 = vmatmul.mubr.f32.gmra.mrb[0].mxu0 %v1324
    %v1475 = vpop.f32.mrb[0].mxu0
    %v1476 = vadd.f32 0.0, %v1475
    %v1477 = vpop.f32.mrb[0].mxu0
    %1478 = vdwg.mxu0
    %1479 = vst [vmem:[%s11] sm:$0xff] %v1441
    %1480 = vst [vmem:[%s11 + $0x8] sm:$0xff] %v1446
    %1481 = vst [vmem:[%s11 + $0x10] sm:$0xff] %v1451
    %1482 = vst [vmem:[%s11 + $0x18] sm:$0xff] %v1456
    %1483 = vst [vmem:[%s11 + $0x20] sm:$0xff] %v1461
    %1484 = vst [vmem:[%s11 + $0x28] sm:$0xff] %v1466
    %1485 = vst [vmem:[%s11 + $0x30] sm:$0xff] %v1471
    %1486 = vst [vmem:[%s11 + $0x38] sm:$0xff] %v1476
    %v1487 = vmul.f32 %v1441, %v1441
    %v1488 = vmul.f32 %v1446, %v1446
    %v1489 = vmul.f32 %v1451, %v1451
    %v1490 = vmul.f32 %v1456, %v1456
    %v1491 = vmul.f32 %v1461, %v1461
    %v1492 = vmul.f32 %v1466, %v1466
    %v1493 = vmul.f32 %v1471, %v1471
    %v1494 = vmul.f32 %v1476, %v1476
    %1495 = vadd.xlane.f32.xlu0 %v1487
    %v1496 = vpop.xlane.xlu0 %1495
    %1497 = vadd.xlane.f32.xlu0 %v1488
    %v1498 = vpop.xlane.xlu0 %1497
    %1499 = vadd.xlane.f32.xlu0 %v1489
    %v1500 = vpop.xlane.xlu0 %1499
    %1501 = vadd.xlane.f32.xlu0 %v1490
    %v1502 = vpop.xlane.xlu0 %1501
    %1503 = vadd.xlane.f32.xlu0 %v1491
    %v1504 = vpop.xlane.xlu0 %1503
    %1505 = vadd.xlane.f32.xlu0 %v1492
    %v1506 = vpop.xlane.xlu0 %1505
    %1507 = vadd.xlane.f32.xlu0 %v1493
    %v1508 = vpop.xlane.xlu0 %1507
    %1509 = vadd.xlane.f32.xlu0 %v1494
    %v1510 = vpop.xlane.xlu0 %1509
    %v1511 = vmax.f32 %v1496, 1e-24
    %v1512 = vmax.f32 %v1498, 1e-24
    %v1513 = vmax.f32 %v1500, 1e-24
    %v1514 = vmax.f32 %v1502, 1e-24
    %v1515 = vmax.f32 %v1504, 1e-24
    %v1516 = vmax.f32 %v1506, 1e-24
    %v1517 = vmax.f32 %v1508, 1e-24
    %v1518 = vmax.f32 %v1510, 1e-24
    %v1519 = vrsqrt.pop %v1511
    %v1520 = vrsqrt.pop %v1512
    %v1521 = vrsqrt.pop %v1513
    %v1522 = vrsqrt.pop %v1514
    %v1523 = vrsqrt.pop %v1515
    %v1524 = vrsqrt.pop %v1516
    %v1525 = vrsqrt.pop %v1517
    %v1526 = vrsqrt.pop %v1518
    %v1527 = vmul.f32 %v1441, %v1519
    %v1528 = vmul.f32 %v1446, %v1520
    %v1529 = vmul.f32 %v1451, %v1521
    %v1530 = vmul.f32 %v1456, %v1522
    %v1531 = vmul.f32 %v1461, %v1523
    %v1532 = vmul.f32 %v1466, %v1524
    %v1533 = vmul.f32 %v1471, %v1525
    %v1534 = vmul.f32 %v1476, %v1526
    %v1535 = vld [vmem:[%s9] sm:$0xff]
    %v1536 = vld [vmem:[%s9 + $0x8] sm:$0xff]
    %v1537 = vld [vmem:[%s9 + $0x10] sm:$0xff]
    %v1538 = vld [vmem:[%s9 + $0x18] sm:$0xff]
    %v1539 = vld [vmem:[%s9 + $0x20] sm:$0xff]
    %v1540 = vld [vmem:[%s9 + $0x28] sm:$0xff]
    %v1541 = vld [vmem:[%s9 + $0x30] sm:$0xff]
    %v1542 = vld [vmem:[%s9 + $0x38] sm:$0xff]
    %v1543 = vld [vmem:[%s9 + $0x40] sm:$0xff]
    %v1544 = vld [vmem:[%s9 + $0x48] sm:$0xff]
    %v1545 = vld [vmem:[%s9 + $0x50] sm:$0xff]
    %v1546 = vld [vmem:[%s9 + $0x58] sm:$0xff]
    %v1547 = vld [vmem:[%s9 + $0x60] sm:$0xff]
    %v1548 = vld [vmem:[%s9 + $0x68] sm:$0xff]
    %v1549 = vld [vmem:[%s9 + $0x70] sm:$0xff]
    %v1550 = vld [vmem:[%s9 + $0x78] sm:$0xff]
    %v1551 = vld [vmem:[#allocation9] sm:$0x1]
    %v1553 = vlaneseq
    %v1554 = vshrl.u32 %v1553, 7
    %v1555 = vsub.s32 0, %v1554
    %v1556 = vrot.slane %v1551, %v1555
    %1558 = vmatprep.subr.mxu0 0.0
    %1559 = vmatpush1.msra.mxu0 %v1535
    %1560 = vmatprep.subr.mxu0 0.0
    %1561 = vmatpush1.msra.mxu0 %v1536
    %1562 = vmatprep.subr.mxu0 0.0
    %1563 = vmatpush1.msra.mxu0 %v1537
    %1564 = vmatprep.subr.mxu0 0.0
    %1565 = vmatpush1.msra.mxu0 %v1538
    %1566 = vmatprep.subr.mxu0 0.0
    %1567 = vmatpush1.msra.mxu0 %v1539
    %1568 = vmatprep.subr.mxu0 0.0
    %1569 = vmatpush1.msra.mxu0 %v1540
    %1570 = vmatprep.subr.mxu0 0.0
    %1571 = vmatpush1.msra.mxu0 %v1541
    %1572 = vmatprep.subr.mxu0 0.0
    %1573 = vmatpush1.msra.mxu0 %v1542
    %1574 = vmatprep.subr.mxu0 0.0
    %1575 = vmatpush1.msra.mxu0 %v1543
    %1576 = vmatprep.subr.mxu0 0.0
    %1577 = vmatpush1.msra.mxu0 %v1544
    %1578 = vmatprep.subr.mxu0 0.0
    %1579 = vmatpush1.msra.mxu0 %v1545
    %1580 = vmatprep.subr.mxu0 0.0
    %1581 = vmatpush1.msra.mxu0 %v1546
    %1582 = vmatprep.subr.mxu0 0.0
    %1583 = vmatpush1.msra.mxu0 %v1547
    %1584 = vmatprep.subr.mxu0 0.0
    %1585 = vmatpush1.msra.mxu0 %v1548
    %1586 = vmatprep.subr.mxu0 0.0
    %1587 = vmatpush1.msra.mxu0 %v1549
    %1588 = vmatprep.subr.mxu0 0.0
    %1589 = vmatpush1.msra.mxu0 %v1550
    %1590 = vmatprep.subr.mxu0 0.0
    %1591 = vmatpush1.msra.mxu0 0.0
    %1592 = vmatprep.subr.mxu0 0.0
    %1593 = vmatpush1.msra.mxu0 0.0
    %1594 = vmatprep.subr.mxu0 0.0
    %1595 = vmatpush1.msra.mxu0 0.0
    %1596 = vmatprep.subr.mxu0 0.0
    %1597 = vmatpush1.msra.mxu0 0.0
    %1598 = vmatprep.subr.mxu0 0.0
    %1599 = vmatpush1.msra.mxu0 0.0
    %1600 = vmatprep.subr.mxu0 0.0
    %1601 = vmatpush1.msra.mxu0 0.0
    %1602 = vmatprep.subr.mxu0 0.0
    %1603 = vmatpush1.msra.mxu0 0.0
    %1604 = vmatprep.subr.mxu0 0.0
    %1605 = vmatpush1.msra.mxu0 0.0
    %1606 = vmatprep.subr.mxu0 0.0
    %1607 = vmatpush1.msra.mxu0 0.0
    %1608 = vmatprep.subr.mxu0 0.0
    %1609 = vmatpush1.msra.mxu0 0.0
    %1610 = vmatprep.subr.mxu0 0.0
    %1611 = vmatpush1.msra.mxu0 0.0
    %1612 = vmatprep.subr.mxu0 0.0
    %1613 = vmatpush1.msra.mxu0 0.0
    %1614 = vmatprep.subr.mxu0 0.0
    %1615 = vmatpush1.msra.mxu0 0.0
    %1616 = vmatprep.subr.mxu0 0.0
    %1617 = vmatpush1.msra.mxu0 0.0
    %1618 = vmatprep.subr.mxu0 0.0
    %1619 = vmatpush1.msra.mxu0 0.0
    %1620 = vmatprep.subr.mxu0 0.0
    %1621 = vmatpush1.msra.mxu0 0.0
    %1622 = vmatprep.mubr.f32.mxu0 0.0
    %1623 = vmatmul.mubr.f32.gmra.mrb[0].mxu0 %v1527
    %v1624 = vpop.f32.mrb[0].mxu0
    %v1625 = vadd.f32 %v1556, %v1624
    %v1626 = vpop.f32.mrb[0].mxu0
    %1627 = vmatprep.mubr.f32.mxu0 0.0
    %1628 = vmatmul.mubr.f32.gmra.mrb[0].mxu0 %v1528
    %v1629 = vpop.f32.mrb[0].mxu0
    %v1630 = vadd.f32 %v1556, %v1629
    %v1631 = vpop.f32.mrb[0].mxu0
    %1632 = vmatprep.mubr.f32.mxu0 0.0
    %1633 = vmatmul.mubr.f32.gmra.mrb[0].mxu0 %v1529
    %v1634 = vpop.f32.mrb[0].mxu0
    %v1635 = vadd.f32 %v1556, %v1634
    %v1636 = vpop.f32.mrb[0].mxu0
    %1637 = vmatprep.mubr.f32.mxu0 0.0
    %1638 = vmatmul.mubr.f32.gmra.mrb[0].mxu0 %v1530
    %v1639 = vpop.f32.mrb[0].mxu0
    %v1640 = vadd.f32 %v1556, %v1639
    %v1641 = vpop.f32.mrb[0].mxu0
    %1642 = vmatprep.mubr.f32.mxu0 0.0
    %1643 = vmatmul.mubr.f32.gmra.mrb[0].mxu0 %v1531
    %v1644 = vpop.f32.mrb[0].mxu0
    %v1645 = vadd.f32 %v1556, %v1644
    %v1646 = vpop.f32.mrb[0].mxu0
    %1647 = vmatprep.mubr.f32.mxu0 0.0
    %1648 = vmatmul.mubr.f32.gmra.mrb[0].mxu0 %v1532
    %v1649 = vpop.f32.mrb[0].mxu0
    %v1650 = vadd.f32 %v1556, %v1649
    %v1651 = vpop.f32.mrb[0].mxu0
    %1652 = vmatprep.mubr.f32.mxu0 0.0
    %1653 = vmatmul.mubr.f32.gmra.mrb[0].mxu0 %v1533
    %v1654 = vpop.f32.mrb[0].mxu0
    %v1655 = vadd.f32 %v1556, %v1654
    %v1656 = vpop.f32.mrb[0].mxu0
    %1657 = vmatprep.mubr.f32.mxu0 0.0
    %1658 = vmatmul.mubr.f32.gmra.mrb[0].mxu0 %v1534
    %v1659 = vpop.f32.mrb[0].mxu0
    %v1660 = vadd.f32 %v1556, %v1659
    %v1661 = vpop.f32.mrb[0].mxu0
    %1662 = vdwg.mxu0
    %1663 = vst [vmem:[%s12] sm:$0xff] %v1625
    %1664 = vst [vmem:[%s12 + $0x8] sm:$0xff] %v1630
    %1665 = vst [vmem:[%s12 + $0x10] sm:$0xff] %v1635
    %1666 = vst [vmem:[%s12 + $0x18] sm:$0xff] %v1640
    %1667 = vst [vmem:[%s12 + $0x20] sm:$0xff] %v1645
    %1668 = vst [vmem:[%s12 + $0x28] sm:$0xff] %v1650
    %1669 = vst [vmem:[%s12 + $0x30] sm:$0xff] %v1655
    %1670 = vst [vmem:[%s12 + $0x38] sm:$0xff] %v1660
    // Predicated region
    $region66: #{net_forward.1} parent=1 // pred_check
      _
    $region67: #{net_forward.1} parent=1 // pred_check_branch
      %1672 = sbr.rel (0) target = $region69
    $region68: #{net_forward.1} parent=1 // pred_region
      _
    $region69: #{net_forward.1} parent=1 // pred_fallthru
      _
    // Predicated region
    $region70: #{net_forward.1} parent=1 // pred_check
      _
    $region71: #{net_forward.1} parent=1 // pred_check_branch
      %1674 = sbr.rel (0) target = $region73
    $region72: #{net_forward.1} parent=1 // pred_region
      _
    $region73: #{net_forward.1} parent=1 // pred_fallthru
      _
    // Predicated region
    $region74: #{net_forward.1} parent=1 // pred_check
      _
    $region75: #{net_forward.1} parent=1 // pred_check_branch
      %1676 = sbr.rel (0) target = $region77
    $region76: #{net_forward.1} parent=1 // pred_region
      _
    $region77: #{net_forward.1} parent=1 // pred_fallthru
      _
    // Predicated region
    $region78: #{net_forward.1} parent=1 // pred_check
      _
    $region79: #{net_forward.1} parent=1 // pred_check_branch
      %1678 = sbr.rel (0) target = $region81
    $region80: #{net_forward.1} parent=1 // pred_region
      _
    $region81: #{net_forward.1} parent=1 // pred_fallthru
      _
    %1679 = vsyncpa [#allocation3], 1
    %1680 = vsyncpa [#allocation5], 1
    %1681 = vsyncpa [#allocation8], 1

</llo_original>
